<compile_context>
chip_gen: v6e
topology: v6e:2x2x1
jax: 0.10.0
libtpu: 0.0.40
codegen_flags: <defaults>
</compile_context>

<pallas_src>
import functools

import jax
import jax.numpy as jnp
from jax import lax
from jax.experimental import pallas as pl
from jax.experimental.pallas import tpu as pltpu


_BRANCHES = ("TV", "AV", "MV", "PV")


# ----------------------------------------------------------------------------
# Fused kernel: 3 x (Conv1d -> AvgPool1d -> ReLU) for all 4 branches at once,
# AdaptiveMaxPool1d, flatten, Linear -> ReLU -> Linear.
# ----------------------------------------------------------------------------
def _fused_forward_kernel(x_ref,
                          w1_ref, b1_ref, p1_ref,
                          w2_ref, b2_ref, p2_ref,
                          w3_ref, b3_ref, p3_ref,
                          fc1w_ref, fc1b_ref, fc2w_ref, fc2b_ref,
                          o_ref, *, K, dims, output_size):
    # h: (L, 4*C) activations; channels of the 4 branches stacked on lanes.
    h = x_ref[...]

    layer_refs = ((w1_ref, b1_ref, p1_ref),
                  (w2_ref, b2_ref, p2_ref),
                  (w3_ref, b3_ref, p3_ref))
    for (w_ref, b_ref, p_ref), (l_out, p_out) in zip(layer_refs, dims):
        # im2col: one block-diagonal matmul per conv layer for all 4 branches.
        xcol = jnp.concatenate([h[k:k + l_out, :] for k in range(K)], axis=1)
        y = jnp.dot(xcol, w_ref[...],
                    preferred_element_type=jnp.float32) + b_ref[...]
        # AvgPool1d(K, stride=K) as a matmul with the precomputed pool matrix.
        pooled = jnp.dot(p_ref[...], y[:p_out * K, :],
                         preferred_element_type=jnp.float32)
        h = jnp.maximum(pooled, 0.0)                       # ReLU

    # AdaptiveMaxPool1d(output_size) along the length (sublane) axis.
    L = dims[-1][1]
    rows = []
    for i in range(output_size):
        s = (i * L) // output_size
        e = -((-(i + 1) * L) // output_size)               # ceil((i+1)*L/O)
        m = h[s:s + 1, :]
        for j in range(s + 1, e):
            m = jnp.maximum(m, h[j:j + 1, :])
        rows.append(m)                                     # (1, 4*C3)
    # Lane-dense (1, output_size * 4 * C3) feature in (pool, branch, channel)
    # order; FC1's weight was permuted on the host to match this order.
    feat = jnp.concatenate(rows, axis=1)

    hid = jnp.dot(feat, fc1w_ref[...],
                  preferred_element_type=jnp.float32) + fc1b_ref[...]
    hid = jnp.maximum(hid, 0.0)
    o_ref[...] = jnp.dot(hid, fc2w_ref[...],
                         preferred_element_type=jnp.float32) + fc2b_ref[...]


# ----------------------------------------------------------------------------
# Host-side parameter packing (done once, outside the kernel)
# ----------------------------------------------------------------------------
def _layer_dims(sig_len, K, n_layers=3):
    dims = []
    L = sig_len
    for _ in range(n_layers):
        l_out = L - K + 1                 # valid conv
        p_out = (l_out - K) // K + 1      # AvgPool1d(K, stride=K)
        dims.append((l_out, p_out))
        L = p_out
    return tuple(dims)


def pack_params(branches, fc, *, kernel_size, output_size, sig_len):
    """Build block-diagonal im2col conv weights (4 branches batched), the
    averaging-pool matrices, and the permuted FC1 weight."""
    K = kernel_size
    nb = len(_BRANCHES)
    dims = _layer_dims(sig_len, K)

    conv_ops = []
    for layer in range(3):
        ws = [branches[n][layer][0] for n in _BRANCHES]    # (co, ci, K) each
        bs = [branches[n][layer][1] for n in _BRANCHES]    # (co,) each
        co, ci, _ = ws[0].shape
        # W_big[k*(nb*ci) + b*ci + c, b*co + o] = w_b[o, c, k]
        w_big = jnp.zeros((K * nb * ci, nb * co), jnp.float32)
        for b, w in enumerate(ws):
            wt = jnp.transpose(w, (2, 1, 0))               # (K, ci, co)
            for k in range(K):
                r0 = k * nb * ci + b * ci
                w_big = w_big.at[r0:r0 + ci, b * co:(b + 1) * co].set(wt[k])
        b_big = jnp.concatenate(bs).reshape(1, nb * co)
        # Non-overlapping averaging matrix: pool[p, j] = 1/K iff j // K == p.
        _, p_out = dims[layer]
        r = jnp.arange(p_out)[:, None]
        c = jnp.arange(p_out * K)[None, :]
        pool = jnp.where(c // K == r, 1.0 / K, 0.0).astype(jnp.float32)
        conv_ops.append((w_big, b_big, pool))

    c3 = branches[_BRANCHES[0]][2][0].shape[0]             # 4 * n_depth
    fc1_w, fc1_b, fc2_w, fc2_b = fc                        # fc1_w: (F, 256)
    n_hidden = fc1_w.shape[1]
    # PyTorch feature order (branch, channel, pool) -> kernel feature order
    # (pool, branch, channel).
    w1p = fc1_w.reshape(nb, c3, output_size, n_hidden)
    w1p = jnp.transpose(w1p, (2, 0, 1, 3)).reshape(output_size * nb * c3,
                                                   n_hidden)
    return {"conv": conv_ops, "fc": (w1p, fc1_b, fc2_w, fc2_b), "dims": dims}


# ----------------------------------------------------------------------------
# Forward (mirrors Conv_1D_classifier.forward) — one pallas_call total.
# ----------------------------------------------------------------------------
def conv1d_classifier_forward(x, packed, *, kernel_size, output_size):
    # .squeeze(0).flatten().view(1, 1, -1).float() per branch; the 4 flat
    # signals are stacked on the lane axis -> (L, 4).
    sal = x["saliencies"]
    xsig = jnp.stack([sal[n].reshape(-1).astype(jnp.float32)
                      for n in _BRANCHES], axis=1)
    (w1, b1, p1), (w2, b2, p2), (w3, b3, p3) = packed["conv"]
    fc1w, fc1b, fc2w, fc2b = packed["fc"]
    n_classes = fc2w.shape[1]

    kern = functools.partial(_fused_forward_kernel, K=kernel_size,
                             dims=packed["dims"], output_size=output_size)
    vmem = pl.BlockSpec(memory_space=pltpu.MemorySpace.VMEM)
    return pl.pallas_call(
        kern,
        out_shape=jax.ShapeDtypeStruct((1, n_classes), jnp.float32),
        in_specs=[vmem] * 14,
        out_specs=vmem,
    )(xsig, w1, b1, p1, w2, b2, p2, w3, b3, p3, fc1w, fc1b, fc2w, fc2b)


# ----------------------------------------------------------------------------
# Parameter init (deterministic, PyTorch-style uniform(-1/sqrt(fan_in), ...))
# ----------------------------------------------------------------------------
def init_params(key, in_channels, n_depth, kernel_size, output_size, n_classes):
    def uinit(k, fan_in, shape):
        bound = 1.0 / float(fan_in) ** 0.5
        return jax.random.uniform(k, shape, jnp.float32, -bound, bound)

    chan_pairs = [(in_channels, n_depth),
                  (n_depth, 2 * n_depth),
                  (2 * n_depth, 4 * n_depth)]
    branches = {}
    for name in _BRANCHES:
        layers = []
        for ci, co in chan_pairs:
            key, kw, kb = jax.random.split(key, 3)
            fan_in = ci * kernel_size
            layers.append((uinit(kw, fan_in, (co, ci, kernel_size)),
                           uinit(kb, fan_in, (co,))))
        branches[name] = layers

    F = output_size * n_depth * 16
    key, k1, k2, k3, k4 = jax.random.split(key, 5)
    fc = (uinit(k1, F, (F, 256)), uinit(k2, F, (1, 256)),
          uinit(k3, 256, (256, n_classes)), uinit(k4, 256, (1, n_classes)))
    return branches, fc


# ----------------------------------------------------------------------------
# Pure-JAX reference (independent lowering, for the correctness check)
# ----------------------------------------------------------------------------
def ref_forward(x, branches, fc, *, kernel_size, output_size):
    def conv1d(h, w, b):
        out = lax.conv_general_dilated(h, w, (1,), "VALID",
                                       dimension_numbers=("NCH", "OIH", "NCH"))
        return out + b[None, :, None]

    def avgpool(h, k):
        L = h.shape[-1]
        P = (L - k) // k + 1
        return jnp.mean(h[..., :P * k].reshape(h.shape[0], h.shape[1], P, k),
                        axis=-1)

    def adamax(h, O):
        L = h.shape[-1]
        cols = []
        for i in range(O):
            s = (i * L) // O
            e = -((-(i + 1) * L) // O)
            cols.append(jnp.max(h[..., s:e], axis=-1, keepdims=True))
        return jnp.concatenate(cols, axis=-1)

    feats = []
    for name in _BRANCHES:
        h = x["saliencies"][name].reshape(1, 1, -1).astype(jnp.float32)
        for w, b in branches[name]:
            h = jnp.maximum(avgpool(conv1d(h, w, b), kernel_size), 0.0)
        h = adamax(h, output_size)
        feats.append(h.reshape(1, -1))
    feat = jnp.concatenate(feats, axis=1)
    fc1_w, fc1_b, fc2_w, fc2_b = fc
    hid = jnp.maximum(feat @ fc1_w + fc1_b, 0.0)
    return hid @ fc2_w + fc2_b


# ----------------------------------------------------------------------------
if __name__ == "__main__":
    in_channels = 1          # forward reshapes input to (1, 1, -1)
    n_depth = 4
    kernel_size = 3
    output_size = 4
    n_classes = 5

    key = jax.random.PRNGKey(0)
    key, kp, kt, ka, km, kv = jax.random.split(key, 6)
    branches, fc = init_params(kp, in_channels, n_depth, kernel_size,
                               output_size, n_classes)

    # Each saliency map: (1, 16, 16) -> flattened length-256 signal.
    x = {"saliencies": {
        "TV": jax.random.uniform(kt, (1, 16, 16), jnp.float32),
        "AV": jax.random.uniform(ka, (1, 16, 16), jnp.float32),
        "MV": jax.random.uniform(km, (1, 16, 16), jnp.float32),
        "PV": jax.random.uniform(kv, (1, 16, 16), jnp.float32),
    }}

    sig_len = x["saliencies"]["TV"].size
    packed = pack_params(branches, fc, kernel_size=kernel_size,
                         output_size=output_size, sig_len=sig_len)

    out = conv1d_classifier_forward(x, packed, kernel_size=kernel_size,
                                    output_size=output_size)
    out = jax.block_until_ready(out)

    ref = ref_forward(x, branches, fc,
                      kernel_size=kernel_size, output_size=output_size)
    assert out.shape == (1, n_classes), out.shape
    assert jnp.allclose(out, ref, atol=1e-3, rtol=1e-3), (out, ref)

    print("KERNEL_OK")
</pallas_src>

<mosaic_0001>
module attributes {stable_mosaic.version = 11 : i64} {
  func.func @_fused_forward_kernel(%arg0: memref<256x4xf32, #tpu.memory_space<vmem>>, %arg1: memref<12x16xf32, #tpu.memory_space<vmem>>, %arg2: memref<1x16xf32, #tpu.memory_space<vmem>>, %arg3: memref<84x252xf32, #tpu.memory_space<vmem>>, %arg4: memref<48x32xf32, #tpu.memory_space<vmem>>, %arg5: memref<1x32xf32, #tpu.memory_space<vmem>>, %arg6: memref<27x81xf32, #tpu.memory_space<vmem>>, %arg7: memref<96x64xf32, #tpu.memory_space<vmem>>, %arg8: memref<1x64xf32, #tpu.memory_space<vmem>>, %arg9: memref<8x24xf32, #tpu.memory_space<vmem>>, %arg10: memref<256x256xf32, #tpu.memory_space<vmem>>, %arg11: memref<1x256xf32, #tpu.memory_space<vmem>>, %arg12: memref<256x5xf32, #tpu.memory_space<vmem>>, %arg13: memref<1x5xf32, #tpu.memory_space<vmem>>, %arg14: memref<1x5xf32, #tpu.memory_space<vmem>>) attributes {dimension_semantics = [], scalar_prefetch = 0 : i64, scratch_operands = 0 : i64, tpu.core_type = #tpu.core_type<tc>} {
    %c0 = arith.constant 0 : index
    %c0_0 = arith.constant 0 : index
    %0 = vector.load %arg0[%c0, %c0_0] : memref<256x4xf32, #tpu.memory_space<vmem>>, vector<256x4xf32>
    %1 = vector.extract_strided_slice %0 {offsets = [0, 0], sizes = [254, 4], strides = [1, 1]} : vector<256x4xf32> to vector<254x4xf32>
    %2 = vector.extract_strided_slice %0 {offsets = [1, 0], sizes = [254, 4], strides = [1, 1]} : vector<256x4xf32> to vector<254x4xf32>
    %3 = vector.extract_strided_slice %0 {offsets = [2, 0], sizes = [254, 4], strides = [1, 1]} : vector<256x4xf32> to vector<254x4xf32>
    %4 = tpu.concatenate %1, %2, %3 in 1 : vector<254x4xf32>, vector<254x4xf32>, vector<254x4xf32> -> vector<254x12xf32>
    %c0_1 = arith.constant 0 : index
    %c0_2 = arith.constant 0 : index
    %5 = vector.load %arg1[%c0_1, %c0_2] : memref<12x16xf32, #tpu.memory_space<vmem>>, vector<12x16xf32>
    %cst = arith.constant dense<0.000000e+00> : vector<254x16xf32>
    %6 = tpu.matmul %4, %5, %cst {dimension_numbers = #tpu.dot_dimension_numbers<[1], [0], [0], [1], [0, 0, 1, 1], [], []>} : vector<254x12xf32>, vector<12x16xf32>, vector<254x16xf32> -> vector<254x16xf32>
    %c0_3 = arith.constant 0 : index
    %c0_4 = arith.constant 0 : index
    %7 = vector.load %arg2[%c0_3, %c0_4] : memref<1x16xf32, #tpu.memory_space<vmem>>, vector<1x16xf32>
    %8 = vector.broadcast %7 : vector<1x16xf32> to vector<254x16xf32>
    %9 = arith.addf %6, %8 : vector<254x16xf32>
    %c0_5 = arith.constant 0 : index
    %c0_6 = arith.constant 0 : index
    %10 = vector.load %arg3[%c0_5, %c0_6] : memref<84x252xf32, #tpu.memory_space<vmem>>, vector<84x252xf32>
    %11 = vector.extract_strided_slice %9 {offsets = [0, 0], sizes = [252, 16], strides = [1, 1]} : vector<254x16xf32> to vector<252x16xf32>
    %cst_7 = arith.constant dense<0.000000e+00> : vector<84x16xf32>
    %12 = tpu.matmul %10, %11, %cst_7 {dimension_numbers = #tpu.dot_dimension_numbers<[1], [0], [0], [1], [0, 0, 1, 1], [], []>} : vector<84x252xf32>, vector<252x16xf32>, vector<84x16xf32> -> vector<84x16xf32>
    %cst_8 = arith.constant 0.000000e+00 : f32
    %13 = vector.broadcast %cst_8 : f32 to vector<84x16xf32>
    %14 = arith.maximumf %12, %13 : vector<84x16xf32>
    %15 = vector.extract_strided_slice %14 {offsets = [0, 0], sizes = [82, 16], strides = [1, 1]} : vector<84x16xf32> to vector<82x16xf32>
    %16 = vector.extract_strided_slice %14 {offsets = [1, 0], sizes = [82, 16], strides = [1, 1]} : vector<84x16xf32> to vector<82x16xf32>
    %17 = vector.extract_strided_slice %14 {offsets = [2, 0], sizes = [82, 16], strides = [1, 1]} : vector<84x16xf32> to vector<82x16xf32>
    %18 = tpu.concatenate %15, %16, %17 in 1 : vector<82x16xf32>, vector<82x16xf32>, vector<82x16xf32> -> vector<82x48xf32>
    %c0_9 = arith.constant 0 : index
    %c0_10 = arith.constant 0 : index
    %19 = vector.load %arg4[%c0_9, %c0_10] : memref<48x32xf32, #tpu.memory_space<vmem>>, vector<48x32xf32>
    %cst_11 = arith.constant dense<0.000000e+00> : vector<82x32xf32>
    %20 = tpu.matmul %18, %19, %cst_11 {dimension_numbers = #tpu.dot_dimension_numbers<[1], [0], [0], [1], [0, 0, 1, 1], [], []>} : vector<82x48xf32>, vector<48x32xf32>, vector<82x32xf32> -> vector<82x32xf32>
    %c0_12 = arith.constant 0 : index
    %c0_13 = arith.constant 0 : index
    %21 = vector.load %arg5[%c0_12, %c0_13] : memref<1x32xf32, #tpu.memory_space<vmem>>, vector<1x32xf32>
    %22 = vector.broadcast %21 : vector<1x32xf32> to vector<82x32xf32>
    %23 = arith.addf %20, %22 : vector<82x32xf32>
    %c0_14 = arith.constant 0 : index
    %c0_15 = arith.constant 0 : index
    %24 = vector.load %arg6[%c0_14, %c0_15] : memref<27x81xf32, #tpu.memory_space<vmem>>, vector<27x81xf32>
    %25 = vector.extract_strided_slice %23 {offsets = [0, 0], sizes = [81, 32], strides = [1, 1]} : vector<82x32xf32> to vector<81x32xf32>
    %cst_16 = arith.constant dense<0.000000e+00> : vector<27x32xf32>
    %26 = tpu.matmul %24, %25, %cst_16 {dimension_numbers = #tpu.dot_dimension_numbers<[1], [0], [0], [1], [0, 0, 1, 1], [], []>} : vector<27x81xf32>, vector<81x32xf32>, vector<27x32xf32> -> vector<27x32xf32>
    %cst_17 = arith.constant 0.000000e+00 : f32
    %27 = vector.broadcast %cst_17 : f32 to vector<27x32xf32>
    %28 = arith.maximumf %26, %27 : vector<27x32xf32>
    %29 = vector.extract_strided_slice %28 {offsets = [0, 0], sizes = [25, 32], strides = [1, 1]} : vector<27x32xf32> to vector<25x32xf32>
    %30 = vector.extract_strided_slice %28 {offsets = [1, 0], sizes = [25, 32], strides = [1, 1]} : vector<27x32xf32> to vector<25x32xf32>
    %31 = vector.extract_strided_slice %28 {offsets = [2, 0], sizes = [25, 32], strides = [1, 1]} : vector<27x32xf32> to vector<25x32xf32>
    %32 = tpu.concatenate %29, %30, %31 in 1 : vector<25x32xf32>, vector<25x32xf32>, vector<25x32xf32> -> vector<25x96xf32>
    %c0_18 = arith.constant 0 : index
    %c0_19 = arith.constant 0 : index
    %33 = vector.load %arg7[%c0_18, %c0_19] : memref<96x64xf32, #tpu.memory_space<vmem>>, vector<96x64xf32>
    %cst_20 = arith.constant dense<0.000000e+00> : vector<25x64xf32>
    %34 = tpu.matmul %32, %33, %cst_20 {dimension_numbers = #tpu.dot_dimension_numbers<[1], [0], [0], [1], [0, 0, 1, 1], [], []>} : vector<25x96xf32>, vector<96x64xf32>, vector<25x64xf32> -> vector<25x64xf32>
    %c0_21 = arith.constant 0 : index
    %c0_22 = arith.constant 0 : index
    %35 = vector.load %arg8[%c0_21, %c0_22] : memref<1x64xf32, #tpu.memory_space<vmem>>, vector<1x64xf32>
    %36 = vector.broadcast %35 : vector<1x64xf32> to vector<25x64xf32>
    %37 = arith.addf %34, %36 : vector<25x64xf32>
    %c0_23 = arith.constant 0 : index
    %c0_24 = arith.constant 0 : index
    %38 = vector.load %arg9[%c0_23, %c0_24] : memref<8x24xf32, #tpu.memory_space<vmem>>, vector<8x24xf32>
    %39 = vector.extract_strided_slice %37 {offsets = [0, 0], sizes = [24, 64], strides = [1, 1]} : vector<25x64xf32> to vector<24x64xf32>
    %cst_25 = arith.constant dense<0.000000e+00> : vector<8x64xf32>
    %40 = tpu.matmul %38, %39, %cst_25 {dimension_numbers = #tpu.dot_dimension_numbers<[1], [0], [0], [1], [0, 0, 1, 1], [], []>} : vector<8x24xf32>, vector<24x64xf32>, vector<8x64xf32> -> vector<8x64xf32>
    %cst_26 = arith.constant 0.000000e+00 : f32
    %41 = vector.broadcast %cst_26 : f32 to vector<8x64xf32>
    %42 = arith.maximumf %40, %41 : vector<8x64xf32>
    %43 = vector.extract_strided_slice %42 {offsets = [0, 0], sizes = [1, 64], strides = [1, 1]} : vector<8x64xf32> to vector<1x64xf32>
    %44 = vector.extract_strided_slice %42 {offsets = [1, 0], sizes = [1, 64], strides = [1, 1]} : vector<8x64xf32> to vector<1x64xf32>
    %45 = arith.maximumf %43, %44 : vector<1x64xf32>
    %46 = vector.extract_strided_slice %42 {offsets = [2, 0], sizes = [1, 64], strides = [1, 1]} : vector<8x64xf32> to vector<1x64xf32>
    %47 = vector.extract_strided_slice %42 {offsets = [3, 0], sizes = [1, 64], strides = [1, 1]} : vector<8x64xf32> to vector<1x64xf32>
    %48 = arith.maximumf %46, %47 : vector<1x64xf32>
    %49 = vector.extract_strided_slice %42 {offsets = [4, 0], sizes = [1, 64], strides = [1, 1]} : vector<8x64xf32> to vector<1x64xf32>
    %50 = vector.extract_strided_slice %42 {offsets = [5, 0], sizes = [1, 64], strides = [1, 1]} : vector<8x64xf32> to vector<1x64xf32>
    %51 = arith.maximumf %49, %50 : vector<1x64xf32>
    %52 = vector.extract_strided_slice %42 {offsets = [6, 0], sizes = [1, 64], strides = [1, 1]} : vector<8x64xf32> to vector<1x64xf32>
    %53 = vector.extract_strided_slice %42 {offsets = [7, 0], sizes = [1, 64], strides = [1, 1]} : vector<8x64xf32> to vector<1x64xf32>
    %54 = arith.maximumf %52, %53 : vector<1x64xf32>
    %55 = tpu.concatenate %45, %48, %51, %54 in 1 : vector<1x64xf32>, vector<1x64xf32>, vector<1x64xf32>, vector<1x64xf32> -> vector<1x256xf32>
    %c0_27 = arith.constant 0 : index
    %c0_28 = arith.constant 0 : index
    %56 = vector.load %arg10[%c0_27, %c0_28] : memref<256x256xf32, #tpu.memory_space<vmem>>, vector<256x256xf32>
    %cst_29 = arith.constant dense<0.000000e+00> : vector<1x256xf32>
    %57 = tpu.matmul %55, %56, %cst_29 {dimension_numbers = #tpu.dot_dimension_numbers<[1], [0], [0], [1], [0, 0, 1, 1], [], []>} : vector<1x256xf32>, vector<256x256xf32>, vector<1x256xf32> -> vector<1x256xf32>
    %c0_30 = arith.constant 0 : index
    %c0_31 = arith.constant 0 : index
    %58 = vector.load %arg11[%c0_30, %c0_31] : memref<1x256xf32, #tpu.memory_space<vmem>>, vector<1x256xf32>
    %59 = arith.addf %57, %58 : vector<1x256xf32>
    %cst_32 = arith.constant 0.000000e+00 : f32
    %60 = vector.broadcast %cst_32 : f32 to vector<1x256xf32>
    %61 = arith.maximumf %59, %60 : vector<1x256xf32>
    %c0_33 = arith.constant 0 : index
    %c0_34 = arith.constant 0 : index
    %62 = vector.load %arg12[%c0_33, %c0_34] : memref<256x5xf32, #tpu.memory_space<vmem>>, vector<256x5xf32>
    %cst_35 = arith.constant dense<0.000000e+00> : vector<1x5xf32>
    %63 = tpu.matmul %61, %62, %cst_35 {dimension_numbers = #tpu.dot_dimension_numbers<[1], [0], [0], [1], [0, 0, 1, 1], [], []>} : vector<1x256xf32>, vector<256x5xf32>, vector<1x5xf32> -> vector<1x5xf32>
    %c0_36 = arith.constant 0 : index
    %c0_37 = arith.constant 0 : index
    %64 = vector.load %arg13[%c0_36, %c0_37] : memref<1x5xf32, #tpu.memory_space<vmem>>, vector<1x5xf32>
    %65 = arith.addf %63, %64 : vector<1x5xf32>
    %c0_38 = arith.constant 0 : index
    %c0_39 = arith.constant 0 : index
    %66 = vector.load %arg14[%c0_38, %c0_39] : memref<1x5xf32, #tpu.memory_space<vmem>>, vector<1x5xf32>
    tpu.vector_store %arg14[%c0_38, %c0_39], %65 {strides = array<i32>} : memref<1x5xf32, #tpu.memory_space<vmem>>, vector<1x5xf32>,
    return
  }
}

</mosaic_0001>

<llo_original>
// kernel: tpu_custom_call.1
$region0: #{tpu_custom_call.1}
  #allocation0 [shape = 'u32[]', space=smem, size = 0x4, offset = 0x4, fixed_abs, tag = 'smem constant byte address 0x4 - core index']
  #allocation1 [shape = 'u32[144,128]{1,0:T(1,128)}', space=vmem, size = 0x12000, scoped, tag = 'internal scratch']
  %s0 = inlined_call_operand.vmem [shape: f32[256,4], index: 0, kind: input, shape index: {}]
  %s1 = inlined_call_operand.vmem [shape: f32[12,16], index: 1, kind: input, shape index: {}]
  %s2 = inlined_call_operand.vmem [shape: f32[1,16], index: 2, kind: input, shape index: {}]
  %s3 = inlined_call_operand.vmem [shape: f32[84,252], index: 3, kind: input, shape index: {}]
  %s4 = inlined_call_operand.vmem [shape: f32[48,32], index: 4, kind: input, shape index: {}]
  %s5 = inlined_call_operand.vmem [shape: f32[1,32], index: 5, kind: input, shape index: {}]
  %s6 = inlined_call_operand.vmem [shape: f32[27,81], index: 6, kind: input, shape index: {}]
  %s7 = inlined_call_operand.vmem [shape: f32[96,64], index: 7, kind: input, shape index: {}]
  %s8 = inlined_call_operand.vmem [shape: f32[1,64], index: 8, kind: input, shape index: {}]
  %s9 = inlined_call_operand.vmem [shape: f32[8,24], index: 9, kind: input, shape index: {}]
  %s10 = inlined_call_operand.vmem [shape: f32[256,256], index: 10, kind: input, shape index: {}]
  %s11 = inlined_call_operand.vmem [shape: f32[1,256], index: 11, kind: input, shape index: {}]
  %s12 = inlined_call_operand.vmem [shape: f32[256,5], index: 12, kind: input, shape index: {}]
  %s13 = inlined_call_operand.vmem [shape: f32[1,5], index: 13, kind: input, shape index: {}]
  %s14 = inlined_call_operand.hbm [shape: f32[1,5], index: 14, kind: output, shape index: {}]
  %s15 = sld [smem:[#allocation0]]
  $region66: #{tpu_custom_call.1} parent=0
    _
  %s17 = ssub.s32 1, %s15
  %s18 = scalar_select 0, %s17, %s15
  $region1: #{tpu_custom_call.1} parent=0
    #allocation2 [shape = 'u8[512]{0}', space=vmem, size = 0x400, scoped, tag = 'output window, operand 0, single buffered']
    #allocation3 [shape = 's32[1]{0}', space=sflag, size = 0x4, scoped, tag = 'scoped memory for tpu_custom_call.1']
    %19 = vsyncpa [#allocation3], 0
    // Predicated region
    $region2: #{tpu_custom_call.1} parent=1 // pred_check
      _
    $region3: #{tpu_custom_call.1} parent=1 // pred_check_branch
      %21 = sbr.rel (0) target = $region5
    $region4: #{tpu_custom_call.1} parent=1 // pred_region
      _
    $region5: #{tpu_custom_call.1} parent=1 // pred_fallthru
      _
    // Predicated region
    $region6: #{tpu_custom_call.1} parent=1 // pred_check
      _
    $region7: #{tpu_custom_call.1} parent=1 // pred_check_branch
      %23 = sbr.rel (0) target = $region9
    $region8: #{tpu_custom_call.1} parent=1 // pred_region
      _
    $region9: #{tpu_custom_call.1} parent=1 // pred_fallthru
      _
    // Predicated region
    $region10: #{tpu_custom_call.1} parent=1 // pred_check
      _
    $region11: #{tpu_custom_call.1} parent=1 // pred_check_branch
      %25 = sbr.rel (0) target = $region13
    $region12: #{tpu_custom_call.1} parent=1 // pred_region
      _
    $region13: #{tpu_custom_call.1} parent=1 // pred_fallthru
      _
    // Predicated region
    $region14: #{tpu_custom_call.1} parent=1 // pred_check
      _
    $region15: #{tpu_custom_call.1} parent=1 // pred_check_branch
      %27 = sbr.rel (0) target = $region17
    $region16: #{tpu_custom_call.1} parent=1 // pred_region
      _
    $region17: #{tpu_custom_call.1} parent=1 // pred_fallthru
      _
    // Predicated region
    $region18: #{tpu_custom_call.1} parent=1 // pred_check
      _
    $region19: #{tpu_custom_call.1} parent=1 // pred_check_branch
      %29 = sbr.rel (0) target = $region21
    $region20: #{tpu_custom_call.1} parent=1 // pred_region
      _
    $region21: #{tpu_custom_call.1} parent=1 // pred_fallthru
      _
    // Predicated region
    $region22: #{tpu_custom_call.1} parent=1 // pred_check
      _
    $region23: #{tpu_custom_call.1} parent=1 // pred_check_branch
      %31 = sbr.rel (0) target = $region25
    $region24: #{tpu_custom_call.1} parent=1 // pred_region
      _
    $region25: #{tpu_custom_call.1} parent=1 // pred_fallthru
      _
    // Predicated region
    $region26: #{tpu_custom_call.1} parent=1 // pred_check
      _
    $region27: #{tpu_custom_call.1} parent=1 // pred_check_branch
      %33 = sbr.rel (0) target = $region29
    $region28: #{tpu_custom_call.1} parent=1 // pred_region
      _
    $region29: #{tpu_custom_call.1} parent=1 // pred_fallthru
      _
    // Predicated region
    $region30: #{tpu_custom_call.1} parent=1 // pred_check
      _
    $region31: #{tpu_custom_call.1} parent=1 // pred_check_branch
      %35 = sbr.rel (0) target = $region33
    $region32: #{tpu_custom_call.1} parent=1 // pred_region
      _
    $region33: #{tpu_custom_call.1} parent=1 // pred_fallthru
      _
    // Predicated region
    $region34: #{tpu_custom_call.1} parent=1 // pred_check
      _
    $region35: #{tpu_custom_call.1} parent=1 // pred_check_branch
      %37 = sbr.rel (0) target = $region37
    $region36: #{tpu_custom_call.1} parent=1 // pred_region
      _
    $region37: #{tpu_custom_call.1} parent=1 // pred_fallthru
      _
    // Predicated region
    $region38: #{tpu_custom_call.1} parent=1 // pred_check
      _
    $region39: #{tpu_custom_call.1} parent=1 // pred_check_branch
      %39 = sbr.rel (0) target = $region41
    $region40: #{tpu_custom_call.1} parent=1 // pred_region
      _
    $region41: #{tpu_custom_call.1} parent=1 // pred_fallthru
      _
    // Predicated region
    $region42: #{tpu_custom_call.1} parent=1 // pred_check
      _
    $region43: #{tpu_custom_call.1} parent=1 // pred_check_branch
      %41 = sbr.rel (0) target = $region45
    $region44: #{tpu_custom_call.1} parent=1 // pred_region
      _
    $region45: #{tpu_custom_call.1} parent=1 // pred_fallthru
      _
    // Predicated region
    $region46: #{tpu_custom_call.1} parent=1 // pred_check
      _
    $region47: #{tpu_custom_call.1} parent=1 // pred_check_branch
      %43 = sbr.rel (0) target = $region49
    $region48: #{tpu_custom_call.1} parent=1 // pred_region
      _
    $region49: #{tpu_custom_call.1} parent=1 // pred_fallthru
      _
    // Predicated region
    $region50: #{tpu_custom_call.1} parent=1 // pred_check
      _
    $region51: #{tpu_custom_call.1} parent=1 // pred_check_branch
      %45 = sbr.rel (0) target = $region53
    $region52: #{tpu_custom_call.1} parent=1 // pred_region
      _
    $region53: #{tpu_custom_call.1} parent=1 // pred_fallthru
      _
    // Predicated region
    $region54: #{tpu_custom_call.1} parent=1 // pred_check
      _
    $region55: #{tpu_custom_call.1} parent=1 // pred_check_branch
      %47 = sbr.rel (0) target = $region57
    $region56: #{tpu_custom_call.1} parent=1 // pred_region
      _
    $region57: #{tpu_custom_call.1} parent=1 // pred_fallthru
      _
    %v48 = vld [vmem:[%s0] sm:$0xff]
    %v49 = vld [vmem:[%s0 + $0x8] sm:$0xff]
    %v50 = vld [vmem:[%s0 + $0x10] sm:$0xff]
    %v51 = vld [vmem:[%s0 + $0x18] sm:$0xff]
    %v52 = vld [vmem:[%s0 + $0x20] sm:$0xff]
    %v53 = vld [vmem:[%s0 + $0x28] sm:$0xff]
    %v54 = vld [vmem:[%s0 + $0x30] sm:$0xff]
    %v55 = vld [vmem:[%s0 + $0x38] sm:$0xff]
    %v56 = vld [vmem:[%s0 + $0x40] sm:$0xff]
    %v57 = vld [vmem:[%s0 + $0x48] sm:$0xff]
    %v58 = vld [vmem:[%s0 + $0x50] sm:$0xff]
    %v59 = vld [vmem:[%s0 + $0x58] sm:$0xff]
    %v60 = vld [vmem:[%s0 + $0x60] sm:$0xff]
    %v61 = vld [vmem:[%s0 + $0x68] sm:$0xff]
    %v62 = vld [vmem:[%s0 + $0x70] sm:$0xff]
    %v63 = vld [vmem:[%s0 + $0x78] sm:$0xff]
    %v64 = vld [vmem:[%s0 + $0x80] sm:$0xff]
    %v65 = vld [vmem:[%s0 + $0x88] sm:$0xff]
    %v66 = vld [vmem:[%s0 + $0x90] sm:$0xff]
    %v67 = vld [vmem:[%s0 + $0x98] sm:$0xff]
    %v68 = vld [vmem:[%s0 + $0xa0] sm:$0xff]
    %v69 = vld [vmem:[%s0 + $0xa8] sm:$0xff]
    %v70 = vld [vmem:[%s0 + $0xb0] sm:$0xff]
    %v71 = vld [vmem:[%s0 + $0xb8] sm:$0xff]
    %v72 = vld [vmem:[%s0 + $0xc0] sm:$0xff]
    %v73 = vld [vmem:[%s0 + $0xc8] sm:$0xff]
    %v74 = vld [vmem:[%s0 + $0xd0] sm:$0xff]
    %v75 = vld [vmem:[%s0 + $0xd8] sm:$0xff]
    %v76 = vld [vmem:[%s0 + $0xe0] sm:$0xff]
    %v77 = vld [vmem:[%s0 + $0xe8] sm:$0xff]
    %v78 = vld [vmem:[%s0 + $0xf0] sm:$0xff]
    %v79 = vld [vmem:[%s0 + $0xf8] sm:$0xff]
    %vm112 = vcmask 1046528
    %v113 = vrot.slane %v48, 1
    %v114 = vrot.slane %v49, 1
    %v115 = vsel %vm112, %v113, %v114
    %v116 = vrot.slane %v50, 1
    %v117 = vsel %vm112, %v114, %v116
    %v118 = vrot.slane %v51, 1
    %v119 = vsel %vm112, %v116, %v118
    %v120 = vrot.slane %v52, 1
    %v121 = vsel %vm112, %v118, %v120
    %v122 = vrot.slane %v53, 1
    %v123 = vsel %vm112, %v120, %v122
    %v124 = vrot.slane %v54, 1
    %v125 = vsel %vm112, %v122, %v124
    %v126 = vrot.slane %v55, 1
    %v127 = vsel %vm112, %v124, %v126
    %v128 = vrot.slane %v56, 1
    %v129 = vsel %vm112, %v126, %v128
    %v130 = vrot.slane %v57, 1
    %v131 = vsel %vm112, %v128, %v130
    %v132 = vrot.slane %v58, 1
    %v133 = vsel %vm112, %v130, %v132
    %v134 = vrot.slane %v59, 1
    %v135 = vsel %vm112, %v132, %v134
    %v136 = vrot.slane %v60, 1
    %v137 = vsel %vm112, %v134, %v136
    %v138 = vrot.slane %v61, 1
    %v139 = vsel %vm112, %v136, %v138
    %v140 = vrot.slane %v62, 1
    %v141 = vsel %vm112, %v138, %v140
    %v142 = vrot.slane %v63, 1
    %v143 = vsel %vm112, %v140, %v142
    %v144 = vrot.slane %v64, 1
    %v145 = vsel %vm112, %v142, %v144
    %v146 = vrot.slane %v65, 1
    %v147 = vsel %vm112, %v144, %v146
    %v148 = vrot.slane %v66, 1
    %v149 = vsel %vm112, %v146, %v148
    %v150 = vrot.slane %v67, 1
    %v151 = vsel %vm112, %v148, %v150
    %v152 = vrot.slane %v68, 1
    %v153 = vsel %vm112, %v150, %v152
    %v154 = vrot.slane %v69, 1
    %v155 = vsel %vm112, %v152, %v154
    %v156 = vrot.slane %v70, 1
    %v157 = vsel %vm112, %v154, %v156
    %v158 = vrot.slane %v71, 1
    %v159 = vsel %vm112, %v156, %v158
    %v160 = vrot.slane %v72, 1
    %v161 = vsel %vm112, %v158, %v160
    %v162 = vrot.slane %v73, 1
    %v163 = vsel %vm112, %v160, %v162
    %v164 = vrot.slane %v74, 1
    %v165 = vsel %vm112, %v162, %v164
    %v166 = vrot.slane %v75, 1
    %v167 = vsel %vm112, %v164, %v166
    %v168 = vrot.slane %v76, 1
    %v169 = vsel %vm112, %v166, %v168
    %v170 = vrot.slane %v77, 1
    %v171 = vsel %vm112, %v168, %v170
    %v172 = vrot.slane %v78, 1
    %v173 = vsel %vm112, %v170, %v172
    %v174 = vrot.slane %v79, 1
    %v175 = vsel %vm112, %v172, %v174
    %176 = vrot.lane.b32.xlu0 %v115, 4
    %v177 = vpop.permute.xlu0 %176
    %178 = vrot.lane.b32.xlu0 %v117, 4
    %v179 = vpop.permute.xlu0 %178
    %180 = vrot.lane.b32.xlu0 %v119, 4
    %v181 = vpop.permute.xlu0 %180
    %182 = vrot.lane.b32.xlu0 %v121, 4
    %v183 = vpop.permute.xlu0 %182
    %184 = vrot.lane.b32.xlu0 %v123, 4
    %v185 = vpop.permute.xlu0 %184
    %186 = vrot.lane.b32.xlu0 %v125, 4
    %v187 = vpop.permute.xlu0 %186
    %188 = vrot.lane.b32.xlu0 %v127, 4
    %v189 = vpop.permute.xlu0 %188
    %190 = vrot.lane.b32.xlu0 %v129, 4
    %v191 = vpop.permute.xlu0 %190
    %192 = vrot.lane.b32.xlu0 %v131, 4
    %v193 = vpop.permute.xlu0 %192
    %194 = vrot.lane.b32.xlu0 %v133, 4
    %v195 = vpop.permute.xlu0 %194
    %196 = vrot.lane.b32.xlu0 %v135, 4
    %v197 = vpop.permute.xlu0 %196
    %198 = vrot.lane.b32.xlu0 %v137, 4
    %v199 = vpop.permute.xlu0 %198
    %200 = vrot.lane.b32.xlu0 %v139, 4
    %v201 = vpop.permute.xlu0 %200
    %202 = vrot.lane.b32.xlu0 %v141, 4
    %v203 = vpop.permute.xlu0 %202
    %204 = vrot.lane.b32.xlu0 %v143, 4
    %v205 = vpop.permute.xlu0 %204
    %206 = vrot.lane.b32.xlu0 %v145, 4
    %v207 = vpop.permute.xlu0 %206
    %208 = vrot.lane.b32.xlu0 %v147, 4
    %v209 = vpop.permute.xlu0 %208
    %210 = vrot.lane.b32.xlu0 %v149, 4
    %v211 = vpop.permute.xlu0 %210
    %212 = vrot.lane.b32.xlu0 %v151, 4
    %v213 = vpop.permute.xlu0 %212
    %214 = vrot.lane.b32.xlu0 %v153, 4
    %v215 = vpop.permute.xlu0 %214
    %216 = vrot.lane.b32.xlu0 %v155, 4
    %v217 = vpop.permute.xlu0 %216
    %218 = vrot.lane.b32.xlu0 %v157, 4
    %v219 = vpop.permute.xlu0 %218
    %220 = vrot.lane.b32.xlu0 %v159, 4
    %v221 = vpop.permute.xlu0 %220
    %222 = vrot.lane.b32.xlu0 %v161, 4
    %v223 = vpop.permute.xlu0 %222
    %224 = vrot.lane.b32.xlu0 %v163, 4
    %v225 = vpop.permute.xlu0 %224
    %226 = vrot.lane.b32.xlu0 %v165, 4
    %v227 = vpop.permute.xlu0 %226
    %228 = vrot.lane.b32.xlu0 %v167, 4
    %v229 = vpop.permute.xlu0 %228
    %230 = vrot.lane.b32.xlu0 %v169, 4
    %v231 = vpop.permute.xlu0 %230
    %232 = vrot.lane.b32.xlu0 %v171, 4
    %v233 = vpop.permute.xlu0 %232
    %234 = vrot.lane.b32.xlu0 %v173, 4
    %v235 = vpop.permute.xlu0 %234
    %236 = vrot.lane.b32.xlu0 %v175, 4
    %v237 = vpop.permute.xlu0 %236
    %238 = vrot.lane.b32.xlu0 %v174, 4
    %v239 = vpop.permute.xlu0 %238
    %vm272 = vcmask 1045504
    %v273 = vrot.slane %v48, 2
    %v274 = vrot.slane %v49, 2
    %v275 = vsel %vm272, %v273, %v274
    %v276 = vrot.slane %v50, 2
    %v277 = vsel %vm272, %v274, %v276
    %v278 = vrot.slane %v51, 2
    %v279 = vsel %vm272, %v276, %v278
    %v280 = vrot.slane %v52, 2
    %v281 = vsel %vm272, %v278, %v280
    %v282 = vrot.slane %v53, 2
    %v283 = vsel %vm272, %v280, %v282
    %v284 = vrot.slane %v54, 2
    %v285 = vsel %vm272, %v282, %v284
    %v286 = vrot.slane %v55, 2
    %v287 = vsel %vm272, %v284, %v286
    %v288 = vrot.slane %v56, 2
    %v289 = vsel %vm272, %v286, %v288
    %v290 = vrot.slane %v57, 2
    %v291 = vsel %vm272, %v288, %v290
    %v292 = vrot.slane %v58, 2
    %v293 = vsel %vm272, %v290, %v292
    %v294 = vrot.slane %v59, 2
    %v295 = vsel %vm272, %v292, %v294
    %v296 = vrot.slane %v60, 2
    %v297 = vsel %vm272, %v294, %v296
    %v298 = vrot.slane %v61, 2
    %v299 = vsel %vm272, %v296, %v298
    %v300 = vrot.slane %v62, 2
    %v301 = vsel %vm272, %v298, %v300
    %v302 = vrot.slane %v63, 2
    %v303 = vsel %vm272, %v300, %v302
    %v304 = vrot.slane %v64, 2
    %v305 = vsel %vm272, %v302, %v304
    %v306 = vrot.slane %v65, 2
    %v307 = vsel %vm272, %v304, %v306
    %v308 = vrot.slane %v66, 2
    %v309 = vsel %vm272, %v306, %v308
    %v310 = vrot.slane %v67, 2
    %v311 = vsel %vm272, %v308, %v310
    %v312 = vrot.slane %v68, 2
    %v313 = vsel %vm272, %v310, %v312
    %v314 = vrot.slane %v69, 2
    %v315 = vsel %vm272, %v312, %v314
    %v316 = vrot.slane %v70, 2
    %v317 = vsel %vm272, %v314, %v316
    %v318 = vrot.slane %v71, 2
    %v319 = vsel %vm272, %v316, %v318
    %v320 = vrot.slane %v72, 2
    %v321 = vsel %vm272, %v318, %v320
    %v322 = vrot.slane %v73, 2
    %v323 = vsel %vm272, %v320, %v322
    %v324 = vrot.slane %v74, 2
    %v325 = vsel %vm272, %v322, %v324
    %v326 = vrot.slane %v75, 2
    %v327 = vsel %vm272, %v324, %v326
    %v328 = vrot.slane %v76, 2
    %v329 = vsel %vm272, %v326, %v328
    %v330 = vrot.slane %v77, 2
    %v331 = vsel %vm272, %v328, %v330
    %v332 = vrot.slane %v78, 2
    %v333 = vsel %vm272, %v330, %v332
    %v334 = vrot.slane %v79, 2
    %v335 = vsel %vm272, %v332, %v334
    %336 = vrot.lane.b32.xlu0 %v275, 8
    %v337 = vpop.permute.xlu0 %336
    %338 = vrot.lane.b32.xlu0 %v277, 8
    %v339 = vpop.permute.xlu0 %338
    %340 = vrot.lane.b32.xlu0 %v279, 8
    %v341 = vpop.permute.xlu0 %340
    %342 = vrot.lane.b32.xlu0 %v281, 8
    %v343 = vpop.permute.xlu0 %342
    %344 = vrot.lane.b32.xlu0 %v283, 8
    %v345 = vpop.permute.xlu0 %344
    %346 = vrot.lane.b32.xlu0 %v285, 8
    %v347 = vpop.permute.xlu0 %346
    %348 = vrot.lane.b32.xlu0 %v287, 8
    %v349 = vpop.permute.xlu0 %348
    %350 = vrot.lane.b32.xlu0 %v289, 8
    %v351 = vpop.permute.xlu0 %350
    %352 = vrot.lane.b32.xlu0 %v291, 8
    %v353 = vpop.permute.xlu0 %352
    %354 = vrot.lane.b32.xlu0 %v293, 8
    %v355 = vpop.permute.xlu0 %354
    %356 = vrot.lane.b32.xlu0 %v295, 8
    %v357 = vpop.permute.xlu0 %356
    %358 = vrot.lane.b32.xlu0 %v297, 8
    %v359 = vpop.permute.xlu0 %358
    %360 = vrot.lane.b32.xlu0 %v299, 8
    %v361 = vpop.permute.xlu0 %360
    %362 = vrot.lane.b32.xlu0 %v301, 8
    %v363 = vpop.permute.xlu0 %362
    %364 = vrot.lane.b32.xlu0 %v303, 8
    %v365 = vpop.permute.xlu0 %364
    %366 = vrot.lane.b32.xlu0 %v305, 8
    %v367 = vpop.permute.xlu0 %366
    %368 = vrot.lane.b32.xlu0 %v307, 8
    %v369 = vpop.permute.xlu0 %368
    %370 = vrot.lane.b32.xlu0 %v309, 8
    %v371 = vpop.permute.xlu0 %370
    %372 = vrot.lane.b32.xlu0 %v311, 8
    %v373 = vpop.permute.xlu0 %372
    %374 = vrot.lane.b32.xlu0 %v313, 8
    %v375 = vpop.permute.xlu0 %374
    %376 = vrot.lane.b32.xlu0 %v315, 8
    %v377 = vpop.permute.xlu0 %376
    %378 = vrot.lane.b32.xlu0 %v317, 8
    %v379 = vpop.permute.xlu0 %378
    %380 = vrot.lane.b32.xlu0 %v319, 8
    %v381 = vpop.permute.xlu0 %380
    %382 = vrot.lane.b32.xlu0 %v321, 8
    %v383 = vpop.permute.xlu0 %382
    %384 = vrot.lane.b32.xlu0 %v323, 8
    %v385 = vpop.permute.xlu0 %384
    %386 = vrot.lane.b32.xlu0 %v325, 8
    %v387 = vpop.permute.xlu0 %386
    %388 = vrot.lane.b32.xlu0 %v327, 8
    %v389 = vpop.permute.xlu0 %388
    %390 = vrot.lane.b32.xlu0 %v329, 8
    %v391 = vpop.permute.xlu0 %390
    %392 = vrot.lane.b32.xlu0 %v331, 8
    %v393 = vpop.permute.xlu0 %392
    %394 = vrot.lane.b32.xlu0 %v333, 8
    %v395 = vpop.permute.xlu0 %394
    %396 = vrot.lane.b32.xlu0 %v335, 8
    %v397 = vpop.permute.xlu0 %396
    %398 = vrot.lane.b32.xlu0 %v334, 8
    %v399 = vpop.permute.xlu0 %398
    %vm432 = vcmask 31744
    %v433 = vsel %vm432, %v48, %v177
    %v434 = vsel %vm432, %v49, %v179
    %v435 = vsel %vm432, %v50, %v181
    %v436 = vsel %vm432, %v51, %v183
    %v437 = vsel %vm432, %v52, %v185
    %v438 = vsel %vm432, %v53, %v187
    %v439 = vsel %vm432, %v54, %v189
    %v440 = vsel %vm432, %v55, %v191
    %v441 = vsel %vm432, %v56, %v193
    %v442 = vsel %vm432, %v57, %v195
    %v443 = vsel %vm432, %v58, %v197
    %v444 = vsel %vm432, %v59, %v199
    %v445 = vsel %vm432, %v60, %v201
    %v446 = vsel %vm432, %v61, %v203
    %v447 = vsel %vm432, %v62, %v205
    %v448 = vsel %vm432, %v63, %v207
    %v449 = vsel %vm432, %v64, %v209
    %v450 = vsel %vm432, %v65, %v211
    %v451 = vsel %vm432, %v66, %v213
    %v452 = vsel %vm432, %v67, %v215
    %v453 = vsel %vm432, %v68, %v217
    %v454 = vsel %vm432, %v69, %v219
    %v455 = vsel %vm432, %v70, %v221
    %v456 = vsel %vm432, %v71, %v223
    %v457 = vsel %vm432, %v72, %v225
    %v458 = vsel %vm432, %v73, %v227
    %v459 = vsel %vm432, %v74, %v229
    %v460 = vsel %vm432, %v75, %v231
    %v461 = vsel %vm432, %v76, %v233
    %v462 = vsel %vm432, %v77, %v235
    %v463 = vsel %vm432, %v78, %v237
    %v464 = vsel %vm432, %v79, %v239
    %vm465 = vcmask 64512
    %v466 = vsel %vm465, %v433, %v337
    %v467 = vsel %vm465, %v434, %v339
    %v468 = vsel %vm465, %v435, %v341
    %v469 = vsel %vm465, %v436, %v343
    %v470 = vsel %vm465, %v437, %v345
    %v471 = vsel %vm465, %v438, %v347
    %v472 = vsel %vm465, %v439, %v349
    %v473 = vsel %vm465, %v440, %v351
    %v474 = vsel %vm465, %v441, %v353
    %v475 = vsel %vm465, %v442, %v355
    %v476 = vsel %vm465, %v443, %v357
    %v477 = vsel %vm465, %v444, %v359
    %v478 = vsel %vm465, %v445, %v361
    %v479 = vsel %vm465, %v446, %v363
    %v480 = vsel %vm465, %v447, %v365
    %v481 = vsel %vm465, %v448, %v367
    %v482 = vsel %vm465, %v449, %v369
    %v483 = vsel %vm465, %v450, %v371
    %v484 = vsel %vm465, %v451, %v373
    %v485 = vsel %vm465, %v452, %v375
    %v486 = vsel %vm465, %v453, %v377
    %v487 = vsel %vm465, %v454, %v379
    %v488 = vsel %vm465, %v455, %v381
    %v489 = vsel %vm465, %v456, %v383
    %v490 = vsel %vm465, %v457, %v385
    %v491 = vsel %vm465, %v458, %v387
    %v492 = vsel %vm465, %v459, %v389
    %v493 = vsel %vm465, %v460, %v391
    %v494 = vsel %vm465, %v461, %v393
    %v495 = vsel %vm465, %v462, %v395
    %v496 = vsel %vm465, %v463, %v397
    %v497 = vsel %vm465, %v464, %v399
    %v498 = vld [vmem:[%s1] sm:$0xff]
    %v499 = vld [vmem:[%s1 + $0x8] sm:$0xf]
    %v500 = vld [vmem:[%s2] sm:$0x1]
    %v502 = vlaneseq
    %v503 = vshrl.u32 %v502, 7
    %v504 = vsub.s32 0, %v503
    %v505 = vrot.slane %v500, %v504
    %vm507 = vcmask 97280
    %v509 = vsel %vm507, %v466, 0
    %v512 = vsel %vm507, %v467, 0
    %v515 = vsel %vm507, %v468, 0
    %v518 = vsel %vm507, %v469, 0
    %v521 = vsel %vm507, %v470, 0
    %v524 = vsel %vm507, %v471, 0
    %v527 = vsel %vm507, %v472, 0
    %v530 = vsel %vm507, %v473, 0
    %v533 = vsel %vm507, %v474, 0
    %v536 = vsel %vm507, %v475, 0
    %v539 = vsel %vm507, %v476, 0
    %v542 = vsel %vm507, %v477, 0
    %v545 = vsel %vm507, %v478, 0
    %v548 = vsel %vm507, %v479, 0
    %v551 = vsel %vm507, %v480, 0
    %v554 = vsel %vm507, %v481, 0
    %v557 = vsel %vm507, %v482, 0
    %v560 = vsel %vm507, %v483, 0
    %v563 = vsel %vm507, %v484, 0
    %v566 = vsel %vm507, %v485, 0
    %v569 = vsel %vm507, %v486, 0
    %v572 = vsel %vm507, %v487, 0
    %v575 = vsel %vm507, %v488, 0
    %v578 = vsel %vm507, %v489, 0
    %v581 = vsel %vm507, %v490, 0
    %v584 = vsel %vm507, %v491, 0
    %v587 = vsel %vm507, %v492, 0
    %v590 = vsel %vm507, %v493, 0
    %v593 = vsel %vm507, %v494, 0
    %v596 = vsel %vm507, %v495, 0
    %v599 = vsel %vm507, %v496, 0
    %v602 = vsel %vm507, %v497, 0
    %vm604 = vcmask 1043456
    %v606 = vsel %vm604, %v499, 0
    %608 = vmatprep.subr.mxu0 0.0
    %609 = vmatpush1.msra.mxu0 0.0
    %610 = vmatprep.subr.mxu0 0.0
    %611 = vmatpush1.msra.mxu0 0.0
    %612 = vmatprep.subr.mxu0 0.0
    %613 = vmatpush1.msra.mxu0 0.0
    %614 = vmatprep.subr.mxu0 0.0
    %615 = vmatpush1.msra.mxu0 0.0
    %616 = vmatprep.subr.mxu0 0.0
    %617 = vmatpush1.msra.mxu0 0.0
    %618 = vmatprep.subr.mxu0 0.0
    %619 = vmatpush1.msra.mxu0 0.0
    %620 = vmatprep.subr.mxu0 0.0
    %621 = vmatpush1.msra.mxu0 0.0
    %622 = vmatprep.subr.mxu0 0.0
    %623 = vmatpush1.msra.mxu0 0.0
    %624 = vmatprep.subr.mxu0 0.0
    %625 = vmatpush1.msra.mxu0 0.0
    %626 = vmatprep.subr.mxu0 0.0
    %627 = vmatpush1.msra.mxu0 0.0
    %628 = vmatprep.subr.mxu0 0.0
    %629 = vmatpush1.msra.mxu0 0.0
    %630 = vmatprep.subr.mxu0 0.0
    %631 = vmatpush1.msra.mxu0 0.0
    %632 = vmatprep.subr.mxu0 0.0
    %633 = vmatpush1.msra.mxu0 0.0
    %634 = vmatprep.subr.mxu0 0.0
    %635 = vmatpush1.msra.mxu0 0.0
    %636 = vmatprep.subr.mxu0 0.0
    %637 = vmatpush1.msra.mxu0 %v606
    %638 = vmatprep.subr.mxu0 0.0
    %639 = vmatpush1.msra.mxu0 %v498
    %640 = vmatprep.subr.mxu0 0.0
    %641 = vmatpush2.msra.mxu0 0.0
    %642 = vmatprep.subr.mxu0 0.0
    %643 = vmatpush2.msra.mxu0 0.0
    %644 = vmatprep.subr.mxu0 0.0
    %645 = vmatpush2.msra.mxu0 0.0
    %646 = vmatprep.subr.mxu0 0.0
    %647 = vmatpush2.msra.mxu0 0.0
    %648 = vmatprep.subr.mxu0 0.0
    %649 = vmatpush2.msra.mxu0 0.0
    %650 = vmatprep.subr.mxu0 0.0
    %651 = vmatpush2.msra.mxu0 0.0
    %652 = vmatprep.subr.mxu0 0.0
    %653 = vmatpush2.msra.mxu0 0.0
    %654 = vmatprep.subr.mxu0 0.0
    %655 = vmatpush2.msra.mxu0 0.0
    %656 = vmatprep.subr.mxu0 0.0
    %657 = vmatpush2.msra.mxu0 0.0
    %658 = vmatprep.subr.mxu0 0.0
    %659 = vmatpush2.msra.mxu0 0.0
    %660 = vmatprep.subr.mxu0 0.0
    %661 = vmatpush2.msra.mxu0 0.0
    %662 = vmatprep.subr.mxu0 0.0
    %663 = vmatpush2.msra.mxu0 0.0
    %664 = vmatprep.subr.mxu0 0.0
    %665 = vmatpush2.msra.mxu0 0.0
    %666 = vmatprep.subr.mxu0 0.0
    %667 = vmatpush2.msra.mxu0 0.0
    %668 = vmatprep.subr.mxu0 0.0
    %669 = vmatpush2.msra.mxu0 0.0
    %670 = vmatprep.subr.mxu0 0.0
    %671 = vmatpush2.msra.mxu0 0.0
    %672 = vmatprep.mubr.f32.mxu0 0.0
    %673 = vmatmul.mubr.f32.gmra.mxu0 %v509
    %v674 = vpop.f32.mrf.mxu0
    %v675 = vadd.f32 %v505, %v674
    %v676 = vpop.f32.mrf.mxu0
    %677 = vmatprep.mubr.f32.mxu0 0.0
    %678 = vmatmul.mubr.f32.gmra.mxu0 %v512
    %v679 = vpop.f32.mrf.mxu0
    %v680 = vadd.f32 %v505, %v679
    %v681 = vpop.f32.mrf.mxu0
    %682 = vmatprep.mubr.f32.mxu0 0.0
    %683 = vmatmul.mubr.f32.gmra.mxu0 %v515
    %v684 = vpop.f32.mrf.mxu0
    %v685 = vadd.f32 %v505, %v684
    %v686 = vpop.f32.mrf.mxu0
    %687 = vmatprep.mubr.f32.mxu0 0.0
    %688 = vmatmul.mubr.f32.gmra.mxu0 %v518
    %v689 = vpop.f32.mrf.mxu0
    %v690 = vadd.f32 %v505, %v689
    %v691 = vpop.f32.mrf.mxu0
    %692 = vmatprep.mubr.f32.mxu0 0.0
    %693 = vmatmul.mubr.f32.gmra.mxu0 %v521
    %v694 = vpop.f32.mrf.mxu0
    %v695 = vadd.f32 %v505, %v694
    %v696 = vpop.f32.mrf.mxu0
    %697 = vmatprep.mubr.f32.mxu0 0.0
    %698 = vmatmul.mubr.f32.gmra.mxu0 %v524
    %v699 = vpop.f32.mrf.mxu0
    %v700 = vadd.f32 %v505, %v699
    %v701 = vpop.f32.mrf.mxu0
    %702 = vmatprep.mubr.f32.mxu0 0.0
    %703 = vmatmul.mubr.f32.gmra.mxu0 %v527
    %v704 = vpop.f32.mrf.mxu0
    %v705 = vadd.f32 %v505, %v704
    %v706 = vpop.f32.mrf.mxu0
    %707 = vmatprep.mubr.f32.mxu0 0.0
    %708 = vmatmul.mubr.f32.gmra.mxu0 %v530
    %v709 = vpop.f32.mrf.mxu0
    %v710 = vadd.f32 %v505, %v709
    %v711 = vpop.f32.mrf.mxu0
    %712 = vmatprep.mubr.f32.mxu0 0.0
    %713 = vmatmul.mubr.f32.gmra.mxu0 %v533
    %v714 = vpop.f32.mrf.mxu0
    %v715 = vadd.f32 %v505, %v714
    %v716 = vpop.f32.mrf.mxu0
    %717 = vmatprep.mubr.f32.mxu0 0.0
    %718 = vmatmul.mubr.f32.gmra.mxu0 %v536
    %v719 = vpop.f32.mrf.mxu0
    %v720 = vadd.f32 %v505, %v719
    %v721 = vpop.f32.mrf.mxu0
    %722 = vmatprep.mubr.f32.mxu0 0.0
    %723 = vmatmul.mubr.f32.gmra.mxu0 %v539
    %v724 = vpop.f32.mrf.mxu0
    %v725 = vadd.f32 %v505, %v724
    %v726 = vpop.f32.mrf.mxu0
    %727 = vmatprep.mubr.f32.mxu0 0.0
    %728 = vmatmul.mubr.f32.gmra.mxu0 %v542
    %v729 = vpop.f32.mrf.mxu0
    %v730 = vadd.f32 %v505, %v729
    %v731 = vpop.f32.mrf.mxu0
    %732 = vmatprep.mubr.f32.mxu0 0.0
    %733 = vmatmul.mubr.f32.gmra.mxu0 %v545
    %v734 = vpop.f32.mrf.mxu0
    %v735 = vadd.f32 %v505, %v734
    %v736 = vpop.f32.mrf.mxu0
    %737 = vmatprep.mubr.f32.mxu0 0.0
    %738 = vmatmul.mubr.f32.gmra.mxu0 %v548
    %v739 = vpop.f32.mrf.mxu0
    %v740 = vadd.f32 %v505, %v739
    %v741 = vpop.f32.mrf.mxu0
    %742 = vmatprep.mubr.f32.mxu0 0.0
    %743 = vmatmul.mubr.f32.gmra.mxu0 %v551
    %v744 = vpop.f32.mrf.mxu0
    %v745 = vadd.f32 %v505, %v744
    %v746 = vpop.f32.mrf.mxu0
    %747 = vmatprep.mubr.f32.mxu0 0.0
    %748 = vmatmul.mubr.f32.gmra.mxu0 %v554
    %v749 = vpop.f32.mrf.mxu0
    %v750 = vadd.f32 %v505, %v749
    %v751 = vpop.f32.mrf.mxu0
    %752 = vmatprep.mubr.f32.mxu0 0.0
    %753 = vmatmul.mubr.f32.gmra.mxu0 %v557
    %v754 = vpop.f32.mrf.mxu0
    %v755 = vadd.f32 %v505, %v754
    %v756 = vpop.f32.mrf.mxu0
    %757 = vmatprep.mubr.f32.mxu0 0.0
    %758 = vmatmul.mubr.f32.gmra.mxu0 %v560
    %v759 = vpop.f32.mrf.mxu0
    %v760 = vadd.f32 %v505, %v759
    %v761 = vpop.f32.mrf.mxu0
    %762 = vmatprep.mubr.f32.mxu0 0.0
    %763 = vmatmul.mubr.f32.gmra.mxu0 %v563
    %v764 = vpop.f32.mrf.mxu0
    %v765 = vadd.f32 %v505, %v764
    %v766 = vpop.f32.mrf.mxu0
    %767 = vmatprep.mubr.f32.mxu0 0.0
    %768 = vmatmul.mubr.f32.gmra.mxu0 %v566
    %v769 = vpop.f32.mrf.mxu0
    %v770 = vadd.f32 %v505, %v769
    %v771 = vpop.f32.mrf.mxu0
    %772 = vmatprep.mubr.f32.mxu0 0.0
    %773 = vmatmul.mubr.f32.gmra.mxu0 %v569
    %v774 = vpop.f32.mrf.mxu0
    %v775 = vadd.f32 %v505, %v774
    %v776 = vpop.f32.mrf.mxu0
    %777 = vmatprep.mubr.f32.mxu0 0.0
    %778 = vmatmul.mubr.f32.gmra.mxu0 %v572
    %v779 = vpop.f32.mrf.mxu0
    %v780 = vadd.f32 %v505, %v779
    %v781 = vpop.f32.mrf.mxu0
    %782 = vmatprep.mubr.f32.mxu0 0.0
    %783 = vmatmul.mubr.f32.gmra.mxu0 %v575
    %v784 = vpop.f32.mrf.mxu0
    %v785 = vadd.f32 %v505, %v784
    %v786 = vpop.f32.mrf.mxu0
    %787 = vmatprep.mubr.f32.mxu0 0.0
    %788 = vmatmul.mubr.f32.gmra.mxu0 %v578
    %v789 = vpop.f32.mrf.mxu0
    %v790 = vadd.f32 %v505, %v789
    %v791 = vpop.f32.mrf.mxu0
    %792 = vmatprep.mubr.f32.mxu0 0.0
    %793 = vmatmul.mubr.f32.gmra.mxu0 %v581
    %v794 = vpop.f32.mrf.mxu0
    %v795 = vadd.f32 %v505, %v794
    %v796 = vpop.f32.mrf.mxu0
    %797 = vmatprep.mubr.f32.mxu0 0.0
    %798 = vmatmul.mubr.f32.gmra.mxu0 %v584
    %v799 = vpop.f32.mrf.mxu0
    %v800 = vadd.f32 %v505, %v799
    %v801 = vpop.f32.mrf.mxu0
    %802 = vmatprep.mubr.f32.mxu0 0.0
    %803 = vmatmul.mubr.f32.gmra.mxu0 %v587
    %v804 = vpop.f32.mrf.mxu0
    %v805 = vadd.f32 %v505, %v804
    %v806 = vpop.f32.mrf.mxu0
    %807 = vmatprep.mubr.f32.mxu0 0.0
    %808 = vmatmul.mubr.f32.gmra.mxu0 %v590
    %v809 = vpop.f32.mrf.mxu0
    %v810 = vadd.f32 %v505, %v809
    %v811 = vpop.f32.mrf.mxu0
    %812 = vmatprep.mubr.f32.mxu0 0.0
    %813 = vmatmul.mubr.f32.gmra.mxu0 %v593
    %v814 = vpop.f32.mrf.mxu0
    %v815 = vadd.f32 %v505, %v814
    %v816 = vpop.f32.mrf.mxu0
    %817 = vmatprep.mubr.f32.mxu0 0.0
    %818 = vmatmul.mubr.f32.gmra.mxu0 %v596
    %v819 = vpop.f32.mrf.mxu0
    %v820 = vadd.f32 %v505, %v819
    %v821 = vpop.f32.mrf.mxu0
    %822 = vmatprep.mubr.f32.mxu0 0.0
    %823 = vmatmul.mubr.f32.gmra.mxu0 %v599
    %v824 = vpop.f32.mrf.mxu0
    %v825 = vadd.f32 %v505, %v824
    %v826 = vpop.f32.mrf.mxu0
    %827 = vmatprep.mubr.f32.mxu0 0.0
    %828 = vmatmul.mubr.f32.gmra.mxu0 %v602
    %v829 = vpop.f32.mrf.mxu0
    %v830 = vadd.f32 %v505, %v829
    %v831 = vpop.f32.mrf.mxu0
    %832 = vdwg.mxu0
    %v833 = vld [vmem:[%s3] sm:$0xff]
    %v834 = vld [vmem:[%s3 + $0x8] sm:$0xff]
    %v835 = vld [vmem:[%s3 + $0x10] sm:$0xff]
    %v836 = vld [vmem:[%s3 + $0x18] sm:$0xff]
    %v837 = vld [vmem:[%s3 + $0x20] sm:$0xff]
    %v838 = vld [vmem:[%s3 + $0x28] sm:$0xff]
    %v839 = vld [vmem:[%s3 + $0x30] sm:$0xff]
    %v840 = vld [vmem:[%s3 + $0x38] sm:$0xff]
    %v841 = vld [vmem:[%s3 + $0x40] sm:$0xff]
    %v842 = vld [vmem:[%s3 + $0x48] sm:$0xff]
    %v843 = vld [vmem:[%s3 + $0x50] sm:$0xff]
    %v844 = vld [vmem:[%s3 + $0x58] sm:$0xff]
    %v845 = vld [vmem:[%s3 + $0x60] sm:$0xff]
    %v846 = vld [vmem:[%s3 + $0x68] sm:$0xff]
    %v847 = vld [vmem:[%s3 + $0x70] sm:$0xff]
    %v848 = vld [vmem:[%s3 + $0x78] sm:$0xff]
    %v849 = vld [vmem:[%s3 + $0x80] sm:$0xff]
    %v850 = vld [vmem:[%s3 + $0x88] sm:$0xff]
    %v851 = vld [vmem:[%s3 + $0x90] sm:$0xff]
    %v852 = vld [vmem:[%s3 + $0x98] sm:$0xff]
    %v853 = vld [vmem:[%s3 + $0xa0] sm:$0xf]
    %v854 = vld [vmem:[%s3 + $0xa8] sm:$0xf]
    %vm855 = vcmask 1014784
    %v857 = vsel %vm855, %v834, 0
    %v860 = vsel %vm855, %v836, 0
    %v863 = vsel %vm855, %v838, 0
    %v866 = vsel %vm855, %v840, 0
    %v869 = vsel %vm855, %v842, 0
    %v872 = vsel %vm855, %v844, 0
    %v875 = vsel %vm855, %v846, 0
    %v878 = vsel %vm855, %v848, 0
    %v881 = vsel %vm855, %v850, 0
    %v884 = vsel %vm855, %v852, 0
    %v887 = vsel %vm855, %v854, 0
    %v890 = vsel %vm604, %v830, 0
    %892 = vmatprep.subr.mxu0 0.0
    %893 = vmatpush1.msra.mxu0 %v750
    %894 = vmatprep.subr.mxu0 0.0
    %895 = vmatpush1.msra.mxu0 %v745
    %896 = vmatprep.subr.mxu0 0.0
    %897 = vmatpush1.msra.mxu0 %v740
    %898 = vmatprep.subr.mxu0 0.0
    %899 = vmatpush1.msra.mxu0 %v735
    %900 = vmatprep.subr.mxu0 0.0
    %901 = vmatpush1.msra.mxu0 %v730
    %902 = vmatprep.subr.mxu0 0.0
    %903 = vmatpush1.msra.mxu0 %v725
    %904 = vmatprep.subr.mxu0 0.0
    %905 = vmatpush1.msra.mxu0 %v720
    %906 = vmatprep.subr.mxu0 0.0
    %907 = vmatpush1.msra.mxu0 %v715
    %908 = vmatprep.subr.mxu0 0.0
    %909 = vmatpush1.msra.mxu0 %v710
    %910 = vmatprep.subr.mxu0 0.0
    %911 = vmatpush1.msra.mxu0 %v705
    %912 = vmatprep.subr.mxu0 0.0
    %913 = vmatpush1.msra.mxu0 %v700
    %914 = vmatprep.subr.mxu0 0.0
    %915 = vmatpush1.msra.mxu0 %v695
    %916 = vmatprep.subr.mxu0 0.0
    %917 = vmatpush1.msra.mxu0 %v690
    %918 = vmatprep.subr.mxu0 0.0
    %919 = vmatpush1.msra.mxu0 %v685
    %920 = vmatprep.subr.mxu0 0.0
    %921 = vmatpush1.msra.mxu0 %v680
    %922 = vmatprep.subr.mxu0 0.0
    %923 = vmatpush1.msra.mxu0 %v675
    %924 = vmatprep.subr.mxu0 0.0
    %925 = vmatpush2.msra.mxu0 %v890
    %926 = vmatprep.subr.mxu0 0.0
    %927 = vmatpush2.msra.mxu0 %v825
    %928 = vmatprep.subr.mxu0 0.0
    %929 = vmatpush2.msra.mxu0 %v820
    %930 = vmatprep.subr.mxu0 0.0
    %931 = vmatpush2.msra.mxu0 %v815
    %932 = vmatprep.subr.mxu0 0.0
    %933 = vmatpush2.msra.mxu0 %v810
    %934 = vmatprep.subr.mxu0 0.0
    %935 = vmatpush2.msra.mxu0 %v805
    %936 = vmatprep.subr.mxu0 0.0
    %937 = vmatpush2.msra.mxu0 %v800
    %938 = vmatprep.subr.mxu0 0.0
    %939 = vmatpush2.msra.mxu0 %v795
    %940 = vmatprep.subr.mxu0 0.0
    %941 = vmatpush2.msra.mxu0 %v790
    %942 = vmatprep.subr.mxu0 0.0
    %943 = vmatpush2.msra.mxu0 %v785
    %944 = vmatprep.subr.mxu0 0.0
    %945 = vmatpush2.msra.mxu0 %v780
    %946 = vmatprep.subr.mxu0 0.0
    %947 = vmatpush2.msra.mxu0 %v775
    %948 = vmatprep.subr.mxu0 0.0
    %949 = vmatpush2.msra.mxu0 %v770
    %950 = vmatprep.subr.mxu0 0.0
    %951 = vmatpush2.msra.mxu0 %v765
    %952 = vmatprep.subr.mxu0 0.0
    %953 = vmatpush2.msra.mxu0 %v760
    %954 = vmatprep.subr.mxu0 0.0
    %955 = vmatpush2.msra.mxu0 %v755
    %956 = vmatprep.mubr.f32.mxu0 %v857
    %957 = vmatmul.mubr.f32.gmra.mxu0 %v833
    %v958 = vpop.f32.mrf.mxu0
    %v959 = vadd.f32 0.0, %v958
    %v960 = vpop.f32.mrf.mxu0
    %961 = vmatprep.mubr.f32.mxu0 %v860
    %962 = vmatmul.mubr.f32.gmra.mxu0 %v835
    %v963 = vpop.f32.mrf.mxu0
    %v964 = vadd.f32 0.0, %v963
    %v965 = vpop.f32.mrf.mxu0
    %966 = vmatprep.mubr.f32.mxu0 %v863
    %967 = vmatmul.mubr.f32.gmra.mxu0 %v837
    %v968 = vpop.f32.mrf.mxu0
    %v969 = vadd.f32 0.0, %v968
    %v970 = vpop.f32.mrf.mxu0
    %971 = vmatprep.mubr.f32.mxu0 %v866
    %972 = vmatmul.mubr.f32.gmra.mxu0 %v839
    %v973 = vpop.f32.mrf.mxu0
    %v974 = vadd.f32 0.0, %v973
    %v975 = vpop.f32.mrf.mxu0
    %976 = vmatprep.mubr.f32.mxu0 %v869
    %977 = vmatmul.mubr.f32.gmra.mxu0 %v841
    %v978 = vpop.f32.mrf.mxu0
    %v979 = vadd.f32 0.0, %v978
    %v980 = vpop.f32.mrf.mxu0
    %981 = vmatprep.mubr.f32.mxu0 %v872
    %982 = vmatmul.mubr.f32.gmra.mxu0 %v843
    %v983 = vpop.f32.mrf.mxu0
    %v984 = vadd.f32 0.0, %v983
    %v985 = vpop.f32.mrf.mxu0
    %986 = vmatprep.mubr.f32.mxu0 %v875
    %987 = vmatmul.mubr.f32.gmra.mxu0 %v845
    %v988 = vpop.f32.mrf.mxu0
    %v989 = vadd.f32 0.0, %v988
    %v990 = vpop.f32.mrf.mxu0
    %991 = vmatprep.mubr.f32.mxu0 %v878
    %992 = vmatmul.mubr.f32.gmra.mxu0 %v847
    %v993 = vpop.f32.mrf.mxu0
    %v994 = vadd.f32 0.0, %v993
    %v995 = vpop.f32.mrf.mxu0
    %996 = vmatprep.mubr.f32.mxu0 %v881
    %997 = vmatmul.mubr.f32.gmra.mxu0 %v849
    %v998 = vpop.f32.mrf.mxu0
    %v999 = vadd.f32 0.0, %v998
    %v1000 = vpop.f32.mrf.mxu0
    %1001 = vmatprep.mubr.f32.mxu0 %v884
    %1002 = vmatmul.mubr.f32.gmra.mxu0 %v851
    %v1003 = vpop.f32.mrf.mxu0
    %v1004 = vadd.f32 0.0, %v1003
    %v1005 = vpop.f32.mrf.mxu0
    %1006 = vmatprep.mubr.f32.mxu0 %v887
    %1007 = vmatmul.mubr.f32.gmra.mxu0 %v853
    %v1008 = vpop.f32.mrf.mxu0
    %v1009 = vadd.f32 0.0, %v1008
    %v1010 = vpop.f32.mrf.mxu0
    %1011 = vdwg.mxu0
    %v1012 = vmax.f32 %v959, 0.0
    %v1013 = vmax.f32 %v964, 0.0
    %v1014 = vmax.f32 %v969, 0.0
    %v1015 = vmax.f32 %v974, 0.0
    %v1016 = vmax.f32 %v979, 0.0
    %v1017 = vmax.f32 %v984, 0.0
    %v1018 = vmax.f32 %v989, 0.0
    %v1019 = vmax.f32 %v994, 0.0
    %v1020 = vmax.f32 %v999, 0.0
    %v1021 = vmax.f32 %v1004, 0.0
    %v1022 = vmax.f32 %v1009, 0.0
    %v1034 = vrot.slane %v1012, 1
    %v1035 = vrot.slane %v1013, 1
    %v1036 = vsel %vm112, %v1034, %v1035
    %v1037 = vrot.slane %v1014, 1
    %v1038 = vsel %vm112, %v1035, %v1037
    %v1039 = vrot.slane %v1015, 1
    %v1040 = vsel %vm112, %v1037, %v1039
    %v1041 = vrot.slane %v1016, 1
    %v1042 = vsel %vm112, %v1039, %v1041
    %v1043 = vrot.slane %v1017, 1
    %v1044 = vsel %vm112, %v1041, %v1043
    %v1045 = vrot.slane %v1018, 1
    %v1046 = vsel %vm112, %v1043, %v1045
    %v1047 = vrot.slane %v1019, 1
    %v1048 = vsel %vm112, %v1045, %v1047
    %v1049 = vrot.slane %v1020, 1
    %v1050 = vsel %vm112, %v1047, %v1049
    %v1051 = vrot.slane %v1021, 1
    %v1052 = vsel %vm112, %v1049, %v1051
    %v1053 = vrot.slane %v1022, 1
    %v1054 = vsel %vm112, %v1051, %v1053
    %1055 = vrot.lane.b32.xlu0 %v1036, 16
    %v1056 = vpop.permute.xlu0 %1055
    %1057 = vrot.lane.b32.xlu0 %v1038, 16
    %v1058 = vpop.permute.xlu0 %1057
    %1059 = vrot.lane.b32.xlu0 %v1040, 16
    %v1060 = vpop.permute.xlu0 %1059
    %1061 = vrot.lane.b32.xlu0 %v1042, 16
    %v1062 = vpop.permute.xlu0 %1061
    %1063 = vrot.lane.b32.xlu0 %v1044, 16
    %v1064 = vpop.permute.xlu0 %1063
    %1065 = vrot.lane.b32.xlu0 %v1046, 16
    %v1066 = vpop.permute.xlu0 %1065
    %1067 = vrot.lane.b32.xlu0 %v1048, 16
    %v1068 = vpop.permute.xlu0 %1067
    %1069 = vrot.lane.b32.xlu0 %v1050, 16
    %v1070 = vpop.permute.xlu0 %1069
    %1071 = vrot.lane.b32.xlu0 %v1052, 16
    %v1072 = vpop.permute.xlu0 %1071
    %1073 = vrot.lane.b32.xlu0 %v1054, 16
    %v1074 = vpop.permute.xlu0 %1073
    %1075 = vrot.lane.b32.xlu0 %v1053, 16
    %v1076 = vpop.permute.xlu0 %1075
    %v1088 = vrot.slane %v1012, 2
    %v1089 = vrot.slane %v1013, 2
    %v1090 = vsel %vm272, %v1088, %v1089
    %v1091 = vrot.slane %v1014, 2
    %v1092 = vsel %vm272, %v1089, %v1091
    %v1093 = vrot.slane %v1015, 2
    %v1094 = vsel %vm272, %v1091, %v1093
    %v1095 = vrot.slane %v1016, 2
    %v1096 = vsel %vm272, %v1093, %v1095
    %v1097 = vrot.slane %v1017, 2
    %v1098 = vsel %vm272, %v1095, %v1097
    %v1099 = vrot.slane %v1018, 2
    %v1100 = vsel %vm272, %v1097, %v1099
    %v1101 = vrot.slane %v1019, 2
    %v1102 = vsel %vm272, %v1099, %v1101
    %v1103 = vrot.slane %v1020, 2
    %v1104 = vsel %vm272, %v1101, %v1103
    %v1105 = vrot.slane %v1021, 2
    %v1106 = vsel %vm272, %v1103, %v1105
    %v1107 = vrot.slane %v1022, 2
    %v1108 = vsel %vm272, %v1105, %v1107
    %1109 = vrot.lane.b32.xlu0 %v1090, 32
    %v1110 = vpop.permute.xlu0 %1109
    %1111 = vrot.lane.b32.xlu0 %v1092, 32
    %v1112 = vpop.permute.xlu0 %1111
    %1113 = vrot.lane.b32.xlu0 %v1094, 32
    %v1114 = vpop.permute.xlu0 %1113
    %1115 = vrot.lane.b32.xlu0 %v1096, 32
    %v1116 = vpop.permute.xlu0 %1115
    %1117 = vrot.lane.b32.xlu0 %v1098, 32
    %v1118 = vpop.permute.xlu0 %1117
    %1119 = vrot.lane.b32.xlu0 %v1100, 32
    %v1120 = vpop.permute.xlu0 %1119
    %1121 = vrot.lane.b32.xlu0 %v1102, 32
    %v1122 = vpop.permute.xlu0 %1121
    %1123 = vrot.lane.b32.xlu0 %v1104, 32
    %v1124 = vpop.permute.xlu0 %1123
    %1125 = vrot.lane.b32.xlu0 %v1106, 32
    %v1126 = vpop.permute.xlu0 %1125
    %1127 = vrot.lane.b32.xlu0 %v1108, 32
    %v1128 = vpop.permute.xlu0 %1127
    %1129 = vrot.lane.b32.xlu0 %v1107, 32
    %v1130 = vpop.permute.xlu0 %1129
    %vm1142 = vcmask 130048
    %v1143 = vsel %vm1142, %v1012, %v1056
    %v1144 = vsel %vm1142, %v1013, %v1058
    %v1145 = vsel %vm1142, %v1014, %v1060
    %v1146 = vsel %vm1142, %v1015, %v1062
    %v1147 = vsel %vm1142, %v1016, %v1064
    %v1148 = vsel %vm1142, %v1017, %v1066
    %v1149 = vsel %vm1142, %v1018, %v1068
    %v1150 = vsel %vm1142, %v1019, %v1070
    %v1151 = vsel %vm1142, %v1020, %v1072
    %v1152 = vsel %vm1142, %v1021, %v1074
    %v1153 = vsel %vm1142, %v1022, %v1076
    %vm1154 = vcmask 261120
    %v1155 = vsel %vm1154, %v1143, %v1110
    %v1156 = vsel %vm1154, %v1144, %v1112
    %v1157 = vsel %vm1154, %v1145, %v1114
    %v1158 = vsel %vm1154, %v1146, %v1116
    %v1159 = vsel %vm1154, %v1147, %v1118
    %v1160 = vsel %vm1154, %v1148, %v1120
    %v1161 = vsel %vm1154, %v1149, %v1122
    %v1162 = vsel %vm1154, %v1150, %v1124
    %v1163 = vsel %vm1154, %v1151, %v1126
    %v1164 = vsel %vm1154, %v1152, %v1128
    %v1165 = vsel %vm1154, %v1153, %v1130
    %v1166 = vld [vmem:[%s4] sm:$0xff]
    %v1167 = vld [vmem:[%s4 + $0x8] sm:$0xff]
    %v1168 = vld [vmem:[%s4 + $0x10] sm:$0xff]
    %v1169 = vld [vmem:[%s4 + $0x18] sm:$0xff]
    %v1170 = vld [vmem:[%s4 + $0x20] sm:$0xff]
    %v1171 = vld [vmem:[%s4 + $0x28] sm:$0xff]
    %v1172 = vld [vmem:[%s5] sm:$0x1]
    %v1174 = vlaneseq
    %v1175 = vshrl.u32 %v1174, 7
    %v1176 = vsub.s32 0, %v1175
    %v1177 = vrot.slane %v1172, %v1176
    %vm1179 = vcmask 392192
    %v1181 = vsel %vm1179, %v1155, 0
    %v1184 = vsel %vm1179, %v1156, 0
    %v1187 = vsel %vm1179, %v1157, 0
    %v1190 = vsel %vm1179, %v1158, 0
    %v1193 = vsel %vm1179, %v1159, 0
    %v1196 = vsel %vm1179, %v1160, 0
    %v1199 = vsel %vm1179, %v1161, 0
    %v1202 = vsel %vm1179, %v1162, 0
    %v1205 = vsel %vm1179, %v1163, 0
    %v1208 = vsel %vm1179, %v1164, 0
    %v1211 = vsel %vm1179, %v1165, 0
    %1213 = vmatprep.subr.mxu0 0.0
    %1214 = vmatpush1.msra.mxu0 0.0
    %1215 = vmatprep.subr.mxu0 0.0
    %1216 = vmatpush1.msra.mxu0 0.0
    %1217 = vmatprep.subr.mxu0 0.0
    %1218 = vmatpush1.msra.mxu0 0.0
    %1219 = vmatprep.subr.mxu0 0.0
    %1220 = vmatpush1.msra.mxu0 0.0
    %1221 = vmatprep.subr.mxu0 0.0
    %1222 = vmatpush1.msra.mxu0 0.0
    %1223 = vmatprep.subr.mxu0 0.0
    %1224 = vmatpush1.msra.mxu0 0.0
    %1225 = vmatprep.subr.mxu0 0.0
    %1226 = vmatpush1.msra.mxu0 0.0
    %1227 = vmatprep.subr.mxu0 0.0
    %1228 = vmatpush1.msra.mxu0 0.0
    %1229 = vmatprep.subr.mxu0 0.0
    %1230 = vmatpush1.msra.mxu0 0.0
    %1231 = vmatprep.subr.mxu0 0.0
    %1232 = vmatpush1.msra.mxu0 0.0
    %1233 = vmatprep.subr.mxu0 0.0
    %1234 = vmatpush1.msra.mxu0 %v1171
    %1235 = vmatprep.subr.mxu0 0.0
    %1236 = vmatpush1.msra.mxu0 %v1170
    %1237 = vmatprep.subr.mxu0 0.0
    %1238 = vmatpush1.msra.mxu0 %v1169
    %1239 = vmatprep.subr.mxu0 0.0
    %1240 = vmatpush1.msra.mxu0 %v1168
    %1241 = vmatprep.subr.mxu0 0.0
    %1242 = vmatpush1.msra.mxu0 %v1167
    %1243 = vmatprep.subr.mxu0 0.0
    %1244 = vmatpush1.msra.mxu0 %v1166
    %1245 = vmatprep.subr.mxu0 0.0
    %1246 = vmatpush2.msra.mxu0 0.0
    %1247 = vmatprep.subr.mxu0 0.0
    %1248 = vmatpush2.msra.mxu0 0.0
    %1249 = vmatprep.subr.mxu0 0.0
    %1250 = vmatpush2.msra.mxu0 0.0
    %1251 = vmatprep.subr.mxu0 0.0
    %1252 = vmatpush2.msra.mxu0 0.0
    %1253 = vmatprep.subr.mxu0 0.0
    %1254 = vmatpush2.msra.mxu0 0.0
    %1255 = vmatprep.subr.mxu0 0.0
    %1256 = vmatpush2.msra.mxu0 0.0
    %1257 = vmatprep.subr.mxu0 0.0
    %1258 = vmatpush2.msra.mxu0 0.0
    %1259 = vmatprep.subr.mxu0 0.0
    %1260 = vmatpush2.msra.mxu0 0.0
    %1261 = vmatprep.subr.mxu0 0.0
    %1262 = vmatpush2.msra.mxu0 0.0
    %1263 = vmatprep.subr.mxu0 0.0
    %1264 = vmatpush2.msra.mxu0 0.0
    %1265 = vmatprep.subr.mxu0 0.0
    %1266 = vmatpush2.msra.mxu0 0.0
    %1267 = vmatprep.subr.mxu0 0.0
    %1268 = vmatpush2.msra.mxu0 0.0
    %1269 = vmatprep.subr.mxu0 0.0
    %1270 = vmatpush2.msra.mxu0 0.0
    %1271 = vmatprep.subr.mxu0 0.0
    %1272 = vmatpush2.msra.mxu0 0.0
    %1273 = vmatprep.subr.mxu0 0.0
    %1274 = vmatpush2.msra.mxu0 0.0
    %1275 = vmatprep.subr.mxu0 0.0
    %1276 = vmatpush2.msra.mxu0 0.0
    %1277 = vmatprep.mubr.f32.mxu0 0.0
    %1278 = vmatmul.mubr.f32.gmra.mxu0 %v1181
    %v1279 = vpop.f32.mrf.mxu0
    %v1280 = vadd.f32 %v1177, %v1279
    %v1281 = vpop.f32.mrf.mxu0
    %1282 = vmatprep.mubr.f32.mxu0 0.0
    %1283 = vmatmul.mubr.f32.gmra.mxu0 %v1184
    %v1284 = vpop.f32.mrf.mxu0
    %v1285 = vadd.f32 %v1177, %v1284
    %v1286 = vpop.f32.mrf.mxu0
    %1287 = vmatprep.mubr.f32.mxu0 0.0
    %1288 = vmatmul.mubr.f32.gmra.mxu0 %v1187
    %v1289 = vpop.f32.mrf.mxu0
    %v1290 = vadd.f32 %v1177, %v1289
    %v1291 = vpop.f32.mrf.mxu0
    %1292 = vmatprep.mubr.f32.mxu0 0.0
    %1293 = vmatmul.mubr.f32.gmra.mxu0 %v1190
    %v1294 = vpop.f32.mrf.mxu0
    %v1295 = vadd.f32 %v1177, %v1294
    %v1296 = vpop.f32.mrf.mxu0
    %1297 = vmatprep.mubr.f32.mxu0 0.0
    %1298 = vmatmul.mubr.f32.gmra.mxu0 %v1193
    %v1299 = vpop.f32.mrf.mxu0
    %v1300 = vadd.f32 %v1177, %v1299
    %v1301 = vpop.f32.mrf.mxu0
    %1302 = vmatprep.mubr.f32.mxu0 0.0
    %1303 = vmatmul.mubr.f32.gmra.mxu0 %v1196
    %v1304 = vpop.f32.mrf.mxu0
    %v1305 = vadd.f32 %v1177, %v1304
    %v1306 = vpop.f32.mrf.mxu0
    %1307 = vmatprep.mubr.f32.mxu0 0.0
    %1308 = vmatmul.mubr.f32.gmra.mxu0 %v1199
    %v1309 = vpop.f32.mrf.mxu0
    %v1310 = vadd.f32 %v1177, %v1309
    %v1311 = vpop.f32.mrf.mxu0
    %1312 = vmatprep.mubr.f32.mxu0 0.0
    %1313 = vmatmul.mubr.f32.gmra.mxu0 %v1202
    %v1314 = vpop.f32.mrf.mxu0
    %v1315 = vadd.f32 %v1177, %v1314
    %v1316 = vpop.f32.mrf.mxu0
    %1317 = vmatprep.mubr.f32.mxu0 0.0
    %1318 = vmatmul.mubr.f32.gmra.mxu0 %v1205
    %v1319 = vpop.f32.mrf.mxu0
    %v1320 = vadd.f32 %v1177, %v1319
    %v1321 = vpop.f32.mrf.mxu0
    %1322 = vmatprep.mubr.f32.mxu0 0.0
    %1323 = vmatmul.mubr.f32.gmra.mxu0 %v1208
    %v1324 = vpop.f32.mrf.mxu0
    %v1325 = vadd.f32 %v1177, %v1324
    %v1326 = vpop.f32.mrf.mxu0
    %1327 = vmatprep.mubr.f32.mxu0 0.0
    %1328 = vmatmul.mubr.f32.gmra.mxu0 %v1211
    %v1329 = vpop.f32.mrf.mxu0
    %v1330 = vadd.f32 %v1177, %v1329
    %v1331 = vpop.f32.mrf.mxu0
    %1332 = vdwg.mxu0
    %v1333 = vld [vmem:[%s6] sm:$0xff]
    %v1334 = vld [vmem:[%s6 + $0x8] sm:$0xff]
    %v1335 = vld [vmem:[%s6 + $0x10] sm:$0xff]
    %v1336 = vld [vmem:[%s6 + $0x18] sm:$0x7]
    %vm1337 = vcmask 662528
    %v1339 = vsel %vm1337, %v1333, 0
    %v1342 = vsel %vm1337, %v1334, 0
    %v1345 = vsel %vm1337, %v1335, 0
    %v1348 = vsel %vm1337, %v1336, 0
    %vm1350 = vcmask 1040384
    %v1352 = vsel %vm1350, %v1330, 0
    %1354 = vmatprep.subr.mxu0 0.0
    %1355 = vmatpush1.msra.mxu0 0.0
    %1356 = vmatprep.subr.mxu0 0.0
    %1357 = vmatpush1.msra.mxu0 0.0
    %1358 = vmatprep.subr.mxu0 0.0
    %1359 = vmatpush1.msra.mxu0 0.0
    %1360 = vmatprep.subr.mxu0 0.0
    %1361 = vmatpush1.msra.mxu0 0.0
    %1362 = vmatprep.subr.mxu0 0.0
    %1363 = vmatpush1.msra.mxu0 0.0
    %1364 = vmatprep.subr.mxu0 0.0
    %1365 = vmatpush1.msra.mxu0 %v1352
    %1366 = vmatprep.subr.mxu0 0.0
    %1367 = vmatpush1.msra.mxu0 %v1325
    %1368 = vmatprep.subr.mxu0 0.0
    %1369 = vmatpush1.msra.mxu0 %v1320
    %1370 = vmatprep.subr.mxu0 0.0
    %1371 = vmatpush1.msra.mxu0 %v1315
    %1372 = vmatprep.subr.mxu0 0.0
    %1373 = vmatpush1.msra.mxu0 %v1310
    %1374 = vmatprep.subr.mxu0 0.0
    %1375 = vmatpush1.msra.mxu0 %v1305
    %1376 = vmatprep.subr.mxu0 0.0
    %1377 = vmatpush1.msra.mxu0 %v1300
    %1378 = vmatprep.subr.mxu0 0.0
    %1379 = vmatpush1.msra.mxu0 %v1295
    %1380 = vmatprep.subr.mxu0 0.0
    %1381 = vmatpush1.msra.mxu0 %v1290
    %1382 = vmatprep.subr.mxu0 0.0
    %1383 = vmatpush1.msra.mxu0 %v1285
    %1384 = vmatprep.subr.mxu0 0.0
    %1385 = vmatpush1.msra.mxu0 %v1280
    %1386 = vmatprep.subr.mxu0 0.0
    %1387 = vmatpush2.msra.mxu0 0.0
    %1388 = vmatprep.subr.mxu0 0.0
    %1389 = vmatpush2.msra.mxu0 0.0
    %1390 = vmatprep.subr.mxu0 0.0
    %1391 = vmatpush2.msra.mxu0 0.0
    %1392 = vmatprep.subr.mxu0 0.0
    %1393 = vmatpush2.msra.mxu0 0.0
    %1394 = vmatprep.subr.mxu0 0.0
    %1395 = vmatpush2.msra.mxu0 0.0
    %1396 = vmatprep.subr.mxu0 0.0
    %1397 = vmatpush2.msra.mxu0 0.0
    %1398 = vmatprep.subr.mxu0 0.0
    %1399 = vmatpush2.msra.mxu0 0.0
    %1400 = vmatprep.subr.mxu0 0.0
    %1401 = vmatpush2.msra.mxu0 0.0
    %1402 = vmatprep.subr.mxu0 0.0
    %1403 = vmatpush2.msra.mxu0 0.0
    %1404 = vmatprep.subr.mxu0 0.0
    %1405 = vmatpush2.msra.mxu0 0.0
    %1406 = vmatprep.subr.mxu0 0.0
    %1407 = vmatpush2.msra.mxu0 0.0
    %1408 = vmatprep.subr.mxu0 0.0
    %1409 = vmatpush2.msra.mxu0 0.0
    %1410 = vmatprep.subr.mxu0 0.0
    %1411 = vmatpush2.msra.mxu0 0.0
    %1412 = vmatprep.subr.mxu0 0.0
    %1413 = vmatpush2.msra.mxu0 0.0
    %1414 = vmatprep.subr.mxu0 0.0
    %1415 = vmatpush2.msra.mxu0 0.0
    %1416 = vmatprep.subr.mxu0 0.0
    %1417 = vmatpush2.msra.mxu0 0.0
    %1418 = vmatprep.mubr.f32.mxu0 0.0
    %1419 = vmatmul.mubr.f32.gmra.mxu0 %v1339
    %v1420 = vpop.f32.mrf.mxu0
    %v1421 = vadd.f32 0.0, %v1420
    %v1422 = vpop.f32.mrf.mxu0
    %1423 = vmatprep.mubr.f32.mxu0 0.0
    %1424 = vmatmul.mubr.f32.gmra.mxu0 %v1342
    %v1425 = vpop.f32.mrf.mxu0
    %v1426 = vadd.f32 0.0, %v1425
    %v1427 = vpop.f32.mrf.mxu0
    %1428 = vmatprep.mubr.f32.mxu0 0.0
    %1429 = vmatmul.mubr.f32.gmra.mxu0 %v1345
    %v1430 = vpop.f32.mrf.mxu0
    %v1431 = vadd.f32 0.0, %v1430
    %v1432 = vpop.f32.mrf.mxu0
    %1433 = vmatprep.mubr.f32.mxu0 0.0
    %1434 = vmatmul.mubr.f32.gmra.mxu0 %v1348
    %v1435 = vpop.f32.mrf.mxu0
    %v1436 = vadd.f32 0.0, %v1435
    %v1437 = vpop.f32.mrf.mxu0
    %1438 = vdwg.mxu0
    %v1439 = vmax.f32 %v1421, 0.0
    %v1440 = vmax.f32 %v1426, 0.0
    %v1441 = vmax.f32 %v1431, 0.0
    %v1442 = vmax.f32 %v1436, 0.0
    %v1447 = vrot.slane %v1439, 1
    %v1448 = vrot.slane %v1440, 1
    %v1449 = vsel %vm112, %v1447, %v1448
    %v1450 = vrot.slane %v1441, 1
    %v1451 = vsel %vm112, %v1448, %v1450
    %v1452 = vrot.slane %v1442, 1
    %v1453 = vsel %vm112, %v1450, %v1452
    %1454 = vrot.lane.b32.xlu0 %v1449, 32
    %v1455 = vpop.permute.xlu0 %1454
    %1456 = vrot.lane.b32.xlu0 %v1451, 32
    %v1457 = vpop.permute.xlu0 %1456
    %1458 = vrot.lane.b32.xlu0 %v1453, 32
    %v1459 = vpop.permute.xlu0 %1458
    %1460 = vrot.lane.b32.xlu0 %v1452, 32
    %v1461 = vpop.permute.xlu0 %1460
    %v1466 = vrot.slane %v1439, 2
    %v1467 = vrot.slane %v1440, 2
    %v1468 = vsel %vm272, %v1466, %v1467
    %v1469 = vrot.slane %v1441, 2
    %v1470 = vsel %vm272, %v1467, %v1469
    %v1471 = vrot.slane %v1442, 2
    %v1472 = vsel %vm272, %v1469, %v1471
    %1473 = vrot.lane.b32.xlu0 %v1468, 64
    %v1474 = vpop.permute.xlu0 %1473
    %1475 = vrot.lane.b32.xlu0 %v1470, 64
    %v1476 = vpop.permute.xlu0 %1475
    %1477 = vrot.lane.b32.xlu0 %v1472, 64
    %v1478 = vpop.permute.xlu0 %1477
    %1479 = vrot.lane.b32.xlu0 %v1471, 64
    %v1480 = vpop.permute.xlu0 %1479
    %v1485 = vsel %vm1154, %v1439, %v1455
    %v1486 = vsel %vm1154, %v1440, %v1457
    %v1487 = vsel %vm1154, %v1441, %v1459
    %v1488 = vsel %vm1154, %v1442, %v1461
    %vm1489 = vcmask 523264
    %v1490 = vsel %vm1489, %v1485, %v1474
    %v1491 = vsel %vm1489, %v1486, %v1476
    %v1492 = vsel %vm1489, %v1487, %v1478
    %v1493 = vsel %vm1489, %v1488, %v1480
    %v1494 = vld [vmem:[%s7] sm:$0xff]
    %v1495 = vld [vmem:[%s7 + $0x8] sm:$0xff]
    %v1496 = vld [vmem:[%s7 + $0x10] sm:$0xff]
    %v1497 = vld [vmem:[%s7 + $0x18] sm:$0xff]
    %v1498 = vld [vmem:[%s7 + $0x20] sm:$0xff]
    %v1499 = vld [vmem:[%s7 + $0x28] sm:$0xff]
    %v1500 = vld [vmem:[%s7 + $0x30] sm:$0xff]
    %v1501 = vld [vmem:[%s7 + $0x38] sm:$0xff]
    %v1502 = vld [vmem:[%s7 + $0x40] sm:$0xff]
    %v1503 = vld [vmem:[%s7 + $0x48] sm:$0xff]
    %v1504 = vld [vmem:[%s7 + $0x50] sm:$0xff]
    %v1505 = vld [vmem:[%s7 + $0x58] sm:$0xff]
    %v1506 = vld [vmem:[%s8] sm:$0x1]
    %v1508 = vlaneseq
    %v1509 = vshrl.u32 %v1508, 7
    %v1510 = vsub.s32 0, %v1509
    %v1511 = vrot.slane %v1506, %v1510
    %vm1513 = vcmask 785408
    %v1515 = vsel %vm1513, %v1490, 0
    %v1518 = vsel %vm1513, %v1491, 0
    %v1521 = vsel %vm1513, %v1492, 0
    %v1524 = vsel %vm1513, %v1493, 0
    %1526 = vmatprep.subr.mxu0 0.0
    %1527 = vmatpush1.msra.mxu0 0.0
    %1528 = vmatprep.subr.mxu0 0.0
    %1529 = vmatpush1.msra.mxu0 0.0
    %1530 = vmatprep.subr.mxu0 0.0
    %1531 = vmatpush1.msra.mxu0 0.0
    %1532 = vmatprep.subr.mxu0 0.0
    %1533 = vmatpush1.msra.mxu0 0.0
    %1534 = vmatprep.subr.mxu0 0.0
    %1535 = vmatpush1.msra.mxu0 %v1505
    %1536 = vmatprep.subr.mxu0 0.0
    %1537 = vmatpush1.msra.mxu0 %v1504
    %1538 = vmatprep.subr.mxu0 0.0
    %1539 = vmatpush1.msra.mxu0 %v1503
    %1540 = vmatprep.subr.mxu0 0.0
    %1541 = vmatpush1.msra.mxu0 %v1502
    %1542 = vmatprep.subr.mxu0 0.0
    %1543 = vmatpush1.msra.mxu0 %v1501
    %1544 = vmatprep.subr.mxu0 0.0
    %1545 = vmatpush1.msra.mxu0 %v1500
    %1546 = vmatprep.subr.mxu0 0.0
    %1547 = vmatpush1.msra.mxu0 %v1499
    %1548 = vmatprep.subr.mxu0 0.0
    %1549 = vmatpush1.msra.mxu0 %v1498
    %1550 = vmatprep.subr.mxu0 0.0
    %1551 = vmatpush1.msra.mxu0 %v1497
    %1552 = vmatprep.subr.mxu0 0.0
    %1553 = vmatpush1.msra.mxu0 %v1496
    %1554 = vmatprep.subr.mxu0 0.0
    %1555 = vmatpush1.msra.mxu0 %v1495
    %1556 = vmatprep.subr.mxu0 0.0
    %1557 = vmatpush1.msra.mxu0 %v1494
    %1558 = vmatprep.subr.mxu0 0.0
    %1559 = vmatpush2.msra.mxu0 0.0
    %1560 = vmatprep.subr.mxu0 0.0
    %1561 = vmatpush2.msra.mxu0 0.0
    %1562 = vmatprep.subr.mxu0 0.0
    %1563 = vmatpush2.msra.mxu0 0.0
    %1564 = vmatprep.subr.mxu0 0.0
    %1565 = vmatpush2.msra.mxu0 0.0
    %1566 = vmatprep.subr.mxu0 0.0
    %1567 = vmatpush2.msra.mxu0 0.0
    %1568 = vmatprep.subr.mxu0 0.0
    %1569 = vmatpush2.msra.mxu0 0.0
    %1570 = vmatprep.subr.mxu0 0.0
    %1571 = vmatpush2.msra.mxu0 0.0
    %1572 = vmatprep.subr.mxu0 0.0
    %1573 = vmatpush2.msra.mxu0 0.0
    %1574 = vmatprep.subr.mxu0 0.0
    %1575 = vmatpush2.msra.mxu0 0.0
    %1576 = vmatprep.subr.mxu0 0.0
    %1577 = vmatpush2.msra.mxu0 0.0
    %1578 = vmatprep.subr.mxu0 0.0
    %1579 = vmatpush2.msra.mxu0 0.0
    %1580 = vmatprep.subr.mxu0 0.0
    %1581 = vmatpush2.msra.mxu0 0.0
    %1582 = vmatprep.subr.mxu0 0.0
    %1583 = vmatpush2.msra.mxu0 0.0
    %1584 = vmatprep.subr.mxu0 0.0
    %1585 = vmatpush2.msra.mxu0 0.0
    %1586 = vmatprep.subr.mxu0 0.0
    %1587 = vmatpush2.msra.mxu0 0.0
    %1588 = vmatprep.subr.mxu0 0.0
    %1589 = vmatpush2.msra.mxu0 0.0
    %1590 = vmatprep.mubr.f32.mxu0 0.0
    %1591 = vmatmul.mubr.f32.gmra.mxu0 %v1515
    %v1592 = vpop.f32.mrf.mxu0
    %v1593 = vadd.f32 %v1511, %v1592
    %v1594 = vpop.f32.mrf.mxu0
    %1595 = vmatprep.mubr.f32.mxu0 0.0
    %1596 = vmatmul.mubr.f32.gmra.mxu0 %v1518
    %v1597 = vpop.f32.mrf.mxu0
    %v1598 = vadd.f32 %v1511, %v1597
    %v1599 = vpop.f32.mrf.mxu0
    %1600 = vmatprep.mubr.f32.mxu0 0.0
    %1601 = vmatmul.mubr.f32.gmra.mxu0 %v1521
    %v1602 = vpop.f32.mrf.mxu0
    %v1603 = vadd.f32 %v1511, %v1602
    %v1604 = vpop.f32.mrf.mxu0
    %1605 = vmatprep.mubr.f32.mxu0 0.0
    %1606 = vmatmul.mubr.f32.gmra.mxu0 %v1524
    %v1607 = vpop.f32.mrf.mxu0
    %v1608 = vpop.f32.mrf.mxu0
    %1609 = vdwg.mxu0
    %v1610 = vld [vmem:[%s9] sm:$0xff]
    %vm1611 = vcmask 195584
    %v1613 = vsel %vm1611, %v1610, 0
    %1615 = vmatprep.subr.mxu0 0.0
    %1616 = vmatpush1.msra.mxu0 0.0
    %1617 = vmatprep.subr.mxu0 0.0
    %1618 = vmatpush1.msra.mxu0 0.0
    %1619 = vmatprep.subr.mxu0 0.0
    %1620 = vmatpush1.msra.mxu0 0.0
    %1621 = vmatprep.subr.mxu0 0.0
    %1622 = vmatpush1.msra.mxu0 0.0
    %1623 = vmatprep.subr.mxu0 0.0
    %1624 = vmatpush1.msra.mxu0 0.0
    %1625 = vmatprep.subr.mxu0 0.0
    %1626 = vmatpush1.msra.mxu0 0.0
    %1627 = vmatprep.subr.mxu0 0.0
    %1628 = vmatpush1.msra.mxu0 0.0
    %1629 = vmatprep.subr.mxu0 0.0
    %1630 = vmatpush1.msra.mxu0 0.0
    %1631 = vmatprep.subr.mxu0 0.0
    %1632 = vmatpush1.msra.mxu0 0.0
    %1633 = vmatprep.subr.mxu0 0.0
    %1634 = vmatpush1.msra.mxu0 0.0
    %1635 = vmatprep.subr.mxu0 0.0
    %1636 = vmatpush1.msra.mxu0 0.0
    %1637 = vmatprep.subr.mxu0 0.0
    %1638 = vmatpush1.msra.mxu0 0.0
    %1639 = vmatprep.subr.mxu0 0.0
    %1640 = vmatpush1.msra.mxu0 0.0
    %1641 = vmatprep.subr.mxu0 0.0
    %1642 = vmatpush1.msra.mxu0 %v1603
    %1643 = vmatprep.subr.mxu0 0.0
    %1644 = vmatpush1.msra.mxu0 %v1598
    %1645 = vmatprep.subr.mxu0 0.0
    %1646 = vmatpush1.msra.mxu0 %v1593
    %1647 = vmatprep.subr.mxu0 0.0
    %1648 = vmatpush2.msra.mxu0 0.0
    %1649 = vmatprep.subr.mxu0 0.0
    %1650 = vmatpush2.msra.mxu0 0.0
    %1651 = vmatprep.subr.mxu0 0.0
    %1652 = vmatpush2.msra.mxu0 0.0
    %1653 = vmatprep.subr.mxu0 0.0
    %1654 = vmatpush2.msra.mxu0 0.0
    %1655 = vmatprep.subr.mxu0 0.0
    %1656 = vmatpush2.msra.mxu0 0.0
    %1657 = vmatprep.subr.mxu0 0.0
    %1658 = vmatpush2.msra.mxu0 0.0
    %1659 = vmatprep.subr.mxu0 0.0
    %1660 = vmatpush2.msra.mxu0 0.0
    %1661 = vmatprep.subr.mxu0 0.0
    %1662 = vmatpush2.msra.mxu0 0.0
    %1663 = vmatprep.subr.mxu0 0.0
    %1664 = vmatpush2.msra.mxu0 0.0
    %1665 = vmatprep.subr.mxu0 0.0
    %1666 = vmatpush2.msra.mxu0 0.0
    %1667 = vmatprep.subr.mxu0 0.0
    %1668 = vmatpush2.msra.mxu0 0.0
    %1669 = vmatprep.subr.mxu0 0.0
    %1670 = vmatpush2.msra.mxu0 0.0
    %1671 = vmatprep.subr.mxu0 0.0
    %1672 = vmatpush2.msra.mxu0 0.0
    %1673 = vmatprep.subr.mxu0 0.0
    %1674 = vmatpush2.msra.mxu0 0.0
    %1675 = vmatprep.subr.mxu0 0.0
    %1676 = vmatpush2.msra.mxu0 0.0
    %1677 = vmatprep.subr.mxu0 0.0
    %1678 = vmatpush2.msra.mxu0 0.0
    %1679 = vmatprep.mubr.f32.mxu0 0.0
    %1680 = vmatmul.mubr.f32.gmra.mxu0 %v1613
    %v1681 = vpop.f32.mrf.mxu0
    %v1682 = vadd.f32 0.0, %v1681
    %v1683 = vpop.f32.mrf.mxu0
    %1684 = vdwg.mxu0
    %v1685 = vmax.f32 %v1682, 0.0
    %v1687 = vrot.slane %v1685, 1
    %v1689 = vmax.f32 %v1685, %v1687
    %v1691 = vrot.slane %v1689, 2
    %1692 = vrot.lane.b32.xlu0 %v1691, 64
    %v1693 = vpop.permute.xlu0 %1692
    %v1695 = vrot.slane %v1689, 4
    %v1697 = vrot.slane %v1689, 6
    %1698 = vrot.lane.b32.xlu0 %v1697, 64
    %v1699 = vpop.permute.xlu0 %1698
    %v1701 = vsel %vm1489, %v1689, %v1693
    %v1702 = vsel %vm1489, %v1695, %v1699
    %v1703 = vld [vmem:[%s10] sm:$0xff]
    %v1704 = vld [vmem:[%s10 + $0x8] sm:$0xff]
    %v1705 = vld [vmem:[%s10 + $0x10] sm:$0xff]
    %v1706 = vld [vmem:[%s10 + $0x18] sm:$0xff]
    %v1707 = vld [vmem:[%s10 + $0x20] sm:$0xff]
    %v1708 = vld [vmem:[%s10 + $0x28] sm:$0xff]
    %v1709 = vld [vmem:[%s10 + $0x30] sm:$0xff]
    %v1710 = vld [vmem:[%s10 + $0x38] sm:$0xff]
    %v1711 = vld [vmem:[%s10 + $0x40] sm:$0xff]
    %v1712 = vld [vmem:[%s10 + $0x48] sm:$0xff]
    %v1713 = vld [vmem:[%s10 + $0x50] sm:$0xff]
    %v1714 = vld [vmem:[%s10 + $0x58] sm:$0xff]
    %v1715 = vld [vmem:[%s10 + $0x60] sm:$0xff]
    %v1716 = vld [vmem:[%s10 + $0x68] sm:$0xff]
    %v1717 = vld [vmem:[%s10 + $0x70] sm:$0xff]
    %v1718 = vld [vmem:[%s10 + $0x78] sm:$0xff]
    %v1719 = vld [vmem:[%s10 + $0x80] sm:$0xff]
    %v1720 = vld [vmem:[%s10 + $0x88] sm:$0xff]
    %v1721 = vld [vmem:[%s10 + $0x90] sm:$0xff]
    %v1722 = vld [vmem:[%s10 + $0x98] sm:$0xff]
    %v1723 = vld [vmem:[%s10 + $0xa0] sm:$0xff]
    %v1724 = vld [vmem:[%s10 + $0xa8] sm:$0xff]
    %v1725 = vld [vmem:[%s10 + $0xb0] sm:$0xff]
    %v1726 = vld [vmem:[%s10 + $0xb8] sm:$0xff]
    %v1727 = vld [vmem:[%s10 + $0xc0] sm:$0xff]
    %v1728 = vld [vmem:[%s10 + $0xc8] sm:$0xff]
    %v1729 = vld [vmem:[%s10 + $0xd0] sm:$0xff]
    %v1730 = vld [vmem:[%s10 + $0xd8] sm:$0xff]
    %v1731 = vld [vmem:[%s10 + $0xe0] sm:$0xff]
    %v1732 = vld [vmem:[%s10 + $0xe8] sm:$0xff]
    %v1733 = vld [vmem:[%s10 + $0xf0] sm:$0xff]
    %v1734 = vld [vmem:[%s10 + $0xf8] sm:$0xff]
    %v1735 = vld [vmem:[%s10 + $0x100] sm:$0xff]
    %v1736 = vld [vmem:[%s10 + $0x108] sm:$0xff]
    %v1737 = vld [vmem:[%s10 + $0x110] sm:$0xff]
    %v1738 = vld [vmem:[%s10 + $0x118] sm:$0xff]
    %v1739 = vld [vmem:[%s10 + $0x120] sm:$0xff]
    %v1740 = vld [vmem:[%s10 + $0x128] sm:$0xff]
    %v1741 = vld [vmem:[%s10 + $0x130] sm:$0xff]
    %v1742 = vld [vmem:[%s10 + $0x138] sm:$0xff]
    %v1743 = vld [vmem:[%s10 + $0x140] sm:$0xff]
    %v1744 = vld [vmem:[%s10 + $0x148] sm:$0xff]
    %v1745 = vld [vmem:[%s10 + $0x150] sm:$0xff]
    %v1746 = vld [vmem:[%s10 + $0x158] sm:$0xff]
    %v1747 = vld [vmem:[%s10 + $0x160] sm:$0xff]
    %v1748 = vld [vmem:[%s10 + $0x168] sm:$0xff]
    %v1749 = vld [vmem:[%s10 + $0x170] sm:$0xff]
    %v1750 = vld [vmem:[%s10 + $0x178] sm:$0xff]
    %v1751 = vld [vmem:[%s10 + $0x180] sm:$0xff]
    %v1752 = vld [vmem:[%s10 + $0x188] sm:$0xff]
    %v1753 = vld [vmem:[%s10 + $0x190] sm:$0xff]
    %v1754 = vld [vmem:[%s10 + $0x198] sm:$0xff]
    %v1755 = vld [vmem:[%s10 + $0x1a0] sm:$0xff]
    %v1756 = vld [vmem:[%s10 + $0x1a8] sm:$0xff]
    %v1757 = vld [vmem:[%s10 + $0x1b0] sm:$0xff]
    %v1758 = vld [vmem:[%s10 + $0x1b8] sm:$0xff]
    %v1759 = vld [vmem:[%s10 + $0x1c0] sm:$0xff]
    %v1760 = vld [vmem:[%s10 + $0x1c8] sm:$0xff]
    %v1761 = vld [vmem:[%s10 + $0x1d0] sm:$0xff]
    %v1762 = vld [vmem:[%s10 + $0x1d8] sm:$0xff]
    %v1763 = vld [vmem:[%s10 + $0x1e0] sm:$0xff]
    %v1764 = vld [vmem:[%s10 + $0x1e8] sm:$0xff]
    %v1765 = vld [vmem:[%s10 + $0x1f0] sm:$0xff]
    %v1766 = vld [vmem:[%s10 + $0x1f8] sm:$0xff]
    %v1767 = vld [vmem:[%s11] sm:$0x3]
    %v1769 = vlaneseq
    %v1770 = vshrl.u32 %v1769, 7
    %v1771 = vsub.s32 0, %v1770
    %v1772 = vrot.slane %v1767, %v1771
    %v1773 = vlaneseq
    %v1774 = vshrl.u32 %v1773, 7
    %v1775 = vsub.s32 1, %v1774
    %v1776 = vrot.slane %v1767, %v1775
    %1779 = vmatprep.subr.mxu0 %v1734
    %1780 = vmatpush1.msra.mxu0 %v1733
    %1781 = vmatprep.subr.mxu0 %v1732
    %1782 = vmatpush1.msra.mxu0 %v1731
    %1783 = vmatprep.subr.mxu0 %v1730
    %1784 = vmatpush1.msra.mxu0 %v1729
    %1785 = vmatprep.subr.mxu0 %v1728
    %1786 = vmatpush1.msra.mxu0 %v1727
    %1787 = vmatprep.subr.mxu0 %v1726
    %1788 = vmatpush1.msra.mxu0 %v1725
    %1789 = vmatprep.subr.mxu0 %v1724
    %1790 = vmatpush1.msra.mxu0 %v1723
    %1791 = vmatprep.subr.mxu0 %v1722
    %1792 = vmatpush1.msra.mxu0 %v1721
    %1793 = vmatprep.subr.mxu0 %v1720
    %1794 = vmatpush1.msra.mxu0 %v1719
    %1795 = vmatprep.subr.mxu0 %v1718
    %1796 = vmatpush1.msra.mxu0 %v1717
    %1797 = vmatprep.subr.mxu0 %v1716
    %1798 = vmatpush1.msra.mxu0 %v1715
    %1799 = vmatprep.subr.mxu0 %v1714
    %1800 = vmatpush1.msra.mxu0 %v1713
    %1801 = vmatprep.subr.mxu0 %v1712
    %1802 = vmatpush1.msra.mxu0 %v1711
    %1803 = vmatprep.subr.mxu0 %v1710
    %1804 = vmatpush1.msra.mxu0 %v1709
    %1805 = vmatprep.subr.mxu0 %v1708
    %1806 = vmatpush1.msra.mxu0 %v1707
    %1807 = vmatprep.subr.mxu0 %v1706
    %1808 = vmatpush1.msra.mxu0 %v1705
    %1809 = vmatprep.subr.mxu0 %v1704
    %1810 = vmatpush1.msra.mxu0 %v1703
    %1811 = vmatprep.subr.mxu0 %v1766
    %1812 = vmatpush2.msra.mxu0 %v1765
    %1813 = vmatprep.subr.mxu0 %v1764
    %1814 = vmatpush2.msra.mxu0 %v1763
    %1815 = vmatprep.subr.mxu0 %v1762
    %1816 = vmatpush2.msra.mxu0 %v1761
    %1817 = vmatprep.subr.mxu0 %v1760
    %1818 = vmatpush2.msra.mxu0 %v1759
    %1819 = vmatprep.subr.mxu0 %v1758
    %1820 = vmatpush2.msra.mxu0 %v1757
    %1821 = vmatprep.subr.mxu0 %v1756
    %1822 = vmatpush2.msra.mxu0 %v1755
    %1823 = vmatprep.subr.mxu0 %v1754
    %1824 = vmatpush2.msra.mxu0 %v1753
    %1825 = vmatprep.subr.mxu0 %v1752
    %1826 = vmatpush2.msra.mxu0 %v1751
    %1827 = vmatprep.subr.mxu0 %v1750
    %1828 = vmatpush2.msra.mxu0 %v1749
    %1829 = vmatprep.subr.mxu0 %v1748
    %1830 = vmatpush2.msra.mxu0 %v1747
    %1831 = vmatprep.subr.mxu0 %v1746
    %1832 = vmatpush2.msra.mxu0 %v1745
    %1833 = vmatprep.subr.mxu0 %v1744
    %1834 = vmatpush2.msra.mxu0 %v1743
    %1835 = vmatprep.subr.mxu0 %v1742
    %1836 = vmatpush2.msra.mxu0 %v1741
    %1837 = vmatprep.subr.mxu0 %v1740
    %1838 = vmatpush2.msra.mxu0 %v1739
    %1839 = vmatprep.subr.mxu0 %v1738
    %1840 = vmatpush2.msra.mxu0 %v1737
    %1841 = vmatprep.subr.mxu0 %v1736
    %1842 = vmatpush2.msra.mxu0 %v1735
    %1843 = vmatprep.mubr.f32.mxu0 %v1702
    %1844 = vmatmul.mubr.f32.gmra.mxu0 %v1701
    %v1845 = vpop.f32.mrf.mxu0
    %v1846 = vadd.f32 %v1772, %v1845
    %v1847 = vpop.f32.mrf.mxu0
    %v1848 = vadd.f32 %v1776, %v1847
    %1849 = vdwg.mxu0
    %v1850 = vmax.f32 %v1846, 0.0
    %v1851 = vmax.f32 %v1848, 0.0
    %v1852 = vld [vmem:[%s12] sm:$0xff]
    %v1853 = vld [vmem:[%s12 + $0x8] sm:$0xff]
    %v1854 = vld [vmem:[%s12 + $0x10] sm:$0xff]
    %v1855 = vld [vmem:[%s12 + $0x18] sm:$0xff]
    %v1856 = vld [vmem:[%s12 + $0x20] sm:$0xff]
    %v1857 = vld [vmem:[%s12 + $0x28] sm:$0xff]
    %v1858 = vld [vmem:[%s12 + $0x30] sm:$0xff]
    %v1859 = vld [vmem:[%s12 + $0x38] sm:$0xff]
    %v1860 = vld [vmem:[%s12 + $0x40] sm:$0xff]
    %v1861 = vld [vmem:[%s12 + $0x48] sm:$0xff]
    %v1862 = vld [vmem:[%s12 + $0x50] sm:$0xff]
    %v1863 = vld [vmem:[%s12 + $0x58] sm:$0xff]
    %v1864 = vld [vmem:[%s12 + $0x60] sm:$0xff]
    %v1865 = vld [vmem:[%s12 + $0x68] sm:$0xff]
    %v1866 = vld [vmem:[%s12 + $0x70] sm:$0xff]
    %v1867 = vld [vmem:[%s12 + $0x78] sm:$0xff]
    %v1868 = vld [vmem:[%s12 + $0x80] sm:$0xff]
    %v1869 = vld [vmem:[%s12 + $0x88] sm:$0xff]
    %v1870 = vld [vmem:[%s12 + $0x90] sm:$0xff]
    %v1871 = vld [vmem:[%s12 + $0x98] sm:$0xff]
    %v1872 = vld [vmem:[%s12 + $0xa0] sm:$0xff]
    %v1873 = vld [vmem:[%s12 + $0xa8] sm:$0xff]
    %v1874 = vld [vmem:[%s12 + $0xb0] sm:$0xff]
    %v1875 = vld [vmem:[%s12 + $0xb8] sm:$0xff]
    %v1876 = vld [vmem:[%s12 + $0xc0] sm:$0xff]
    %v1877 = vld [vmem:[%s12 + $0xc8] sm:$0xff]
    %v1878 = vld [vmem:[%s12 + $0xd0] sm:$0xff]
    %v1879 = vld [vmem:[%s12 + $0xd8] sm:$0xff]
    %v1880 = vld [vmem:[%s12 + $0xe0] sm:$0xff]
    %v1881 = vld [vmem:[%s12 + $0xe8] sm:$0xff]
    %v1882 = vld [vmem:[%s12 + $0xf0] sm:$0xff]
    %v1883 = vld [vmem:[%s12 + $0xf8] sm:$0xff]
    %v1884 = vld [vmem:[%s13] sm:$0x1]
    %1885 = vmatprep.subr.mxu0 0.0
    %1886 = vmatpush1.msra.mxu0 %v1867
    %1887 = vmatprep.subr.mxu0 0.0
    %1888 = vmatpush1.msra.mxu0 %v1866
    %1889 = vmatprep.subr.mxu0 0.0
    %1890 = vmatpush1.msra.mxu0 %v1865
    %1891 = vmatprep.subr.mxu0 0.0
    %1892 = vmatpush1.msra.mxu0 %v1864
    %1893 = vmatprep.subr.mxu0 0.0
    %1894 = vmatpush1.msra.mxu0 %v1863
    %1895 = vmatprep.subr.mxu0 0.0
    %1896 = vmatpush1.msra.mxu0 %v1862
    %1897 = vmatprep.subr.mxu0 0.0
    %1898 = vmatpush1.msra.mxu0 %v1861
    %1899 = vmatprep.subr.mxu0 0.0
    %1900 = vmatpush1.msra.mxu0 %v1860
    %1901 = vmatprep.subr.mxu0 0.0
    %1902 = vmatpush1.msra.mxu0 %v1859
    %1903 = vmatprep.subr.mxu0 0.0
    %1904 = vmatpush1.msra.mxu0 %v1858
    %1905 = vmatprep.subr.mxu0 0.0
    %1906 = vmatpush1.msra.mxu0 %v1857
    %1907 = vmatprep.subr.mxu0 0.0
    %1908 = vmatpush1.msra.mxu0 %v1856
    %1909 = vmatprep.subr.mxu0 0.0
    %1910 = vmatpush1.msra.mxu0 %v1855
    %1911 = vmatprep.subr.mxu0 0.0
    %1912 = vmatpush1.msra.mxu0 %v1854
    %1913 = vmatprep.subr.mxu0 0.0
    %1914 = vmatpush1.msra.mxu0 %v1853
    %1915 = vmatprep.subr.mxu0 0.0
    %1916 = vmatpush1.msra.mxu0 %v1852
    %1917 = vmatprep.subr.mxu0 0.0
    %1918 = vmatpush2.msra.mxu0 %v1883
    %1919 = vmatprep.subr.mxu0 0.0
    %1920 = vmatpush2.msra.mxu0 %v1882
    %1921 = vmatprep.subr.mxu0 0.0
    %1922 = vmatpush2.msra.mxu0 %v1881
    %1923 = vmatprep.subr.mxu0 0.0
    %1924 = vmatpush2.msra.mxu0 %v1880
    %1925 = vmatprep.subr.mxu0 0.0
    %1926 = vmatpush2.msra.mxu0 %v1879
    %1927 = vmatprep.subr.mxu0 0.0
    %1928 = vmatpush2.msra.mxu0 %v1878
    %1929 = vmatprep.subr.mxu0 0.0
    %1930 = vmatpush2.msra.mxu0 %v1877
    %1931 = vmatprep.subr.mxu0 0.0
    %1932 = vmatpush2.msra.mxu0 %v1876
    %1933 = vmatprep.subr.mxu0 0.0
    %1934 = vmatpush2.msra.mxu0 %v1875
    %1935 = vmatprep.subr.mxu0 0.0
    %1936 = vmatpush2.msra.mxu0 %v1874
    %1937 = vmatprep.subr.mxu0 0.0
    %1938 = vmatpush2.msra.mxu0 %v1873
    %1939 = vmatprep.subr.mxu0 0.0
    %1940 = vmatpush2.msra.mxu0 %v1872
    %1941 = vmatprep.subr.mxu0 0.0
    %1942 = vmatpush2.msra.mxu0 %v1871
    %1943 = vmatprep.subr.mxu0 0.0
    %1944 = vmatpush2.msra.mxu0 %v1870
    %1945 = vmatprep.subr.mxu0 0.0
    %1946 = vmatpush2.msra.mxu0 %v1869
    %1947 = vmatprep.subr.mxu0 0.0
    %1948 = vmatpush2.msra.mxu0 %v1868
    %1949 = vmatprep.mubr.f32.mxu0 %v1851
    %1950 = vmatmul.mubr.f32.gmra.mxu0 %v1850
    %v1951 = vpop.f32.mrf.mxu0
    %v1952 = vadd.f32 %v1884, %v1951
    %v1953 = vpop.f32.mrf.mxu0
    %1954 = vdwg.mxu0
    %vm1955 = vcmask 32768
    %1956 = vst.msk [vmem:[#allocation2] sm:$0x1] %vm1955, %v1952
    // Predicated region
    $region58: #{tpu_custom_call.1} parent=1 // pred_check
      _
    $region59: #{tpu_custom_call.1} parent=1 // pred_check_branch
      %1958 = sbr.rel (0) target = $region61
    $region60: #{tpu_custom_call.1} parent=1 // pred_region
      %s1960 = ssub.s32 16, 16
      %1961 = vsyncadd [#allocation3], %s1960
      %s1963 = sshll.u32 [#allocation2], 4
      %s1964 = int_to_ptr.vmem [resolvable:$true] %s1963
      %1966 = dma.vmem_to_hbm [thread:$0]  %s1964, 16, %s14, [#allocation3]
    $region61: #{tpu_custom_call.1} parent=1 // pred_fallthru
      _
    // Predicated region
    $region62: #{tpu_custom_call.1} parent=1 // pred_check
      _
    $region63: #{tpu_custom_call.1} parent=1 // pred_check_branch
      %1968 = sbr.rel (0) target = $region65
    $region64: #{tpu_custom_call.1} parent=1 // pred_region
      %1969 = dma.done [#allocation3], 16
    $region65: #{tpu_custom_call.1} parent=1 // pred_fallthru
      _
    %1970 = vsyncpa [#allocation3], 1

</llo_original>
